<compile_context>
chip_gen: v7x
topology: tpu7x:2x2x1
jax: 0.10.0
libtpu: 0.0.40
codegen_flags: <defaults>
</compile_context>

<pallas_src>
import math
import functools

import jax
import jax.numpy as jnp
import numpy as np
from jax import lax
from jax.experimental import pallas as pl
from jax.experimental.pallas import tpu as pltpu


# ----------------------------- in-kernel helpers -----------------------------

def _gelu_tanh(x):
    # matches torch.nn.GELU(approximate='tanh')
    c = math.sqrt(2.0 / math.pi)
    return 0.5 * x * (1.0 + jnp.tanh(c * (x + 0.044715 * x * x * x)))


def _layer_norm(x, w, b, eps=1e-5):
    mu = jnp.mean(x, axis=-1, keepdims=True)
    var = jnp.mean((x - mu) ** 2, axis=-1, keepdims=True)
    return (x - mu) * lax.rsqrt(var + eps) * w + b


# --------------------------------- kernel ------------------------------------

def block_kernel(x_ref, bias_ref,
                 ln1_w_ref, ln1_b_ref,
                 wqkv_ref, bqkv_ref,
                 wproj_ref, bproj_ref,
                 ln2_w_ref, ln2_b_ref,
                 wfc_ref, bfc_ref,
                 wfcp_ref, bfcp_ref,
                 o_ref, *, n_head):
    x = x_ref[0].astype(jnp.float32)                         # (M, C), M = Bb*T
    M, C = x.shape
    hd = C // n_head

    # ---------------- attention branch ----------------
    h1 = _layer_norm(x, ln1_w_ref[0], ln1_b_ref[0])          # f32
    # Fused QKV projection: one wide bf16 matmul (N = 3C) instead of 3*n_head
    # narrow per-head matmuls.  Softmax scale pre-folded into the q columns.
    qkv = jnp.dot(h1.astype(jnp.bfloat16), wqkv_ref[...],
                  preferred_element_type=jnp.float32) + bqkv_ref[0]    # (M, 3C)

    # Block-diagonal causal bias (0 / -1e30): grid-invariant input built once
    # in the wrapper -- never recomputed per step; also separates batch rows.
    bias = bias_ref[...]                                     # (M, M) f32

    # Static loop over heads; per-head q/k/v are vreg-local lane slices of the
    # fused (M, 3C) result.  Head outputs accumulate straight through the
    # head-major output projection (no concatenate).
    # TODO(synk): for production T, tile T into the grid flash-style and cap
    # this unroll instead of fully unrolling over heads.
    att = jnp.zeros((M, C), jnp.float32)
    for h in range(n_head):
        q = qkv[:, h * hd:(h + 1) * hd]                      # (M, hd) f32, scaled
        k = qkv[:, C + h * hd:C + (h + 1) * hd]              # (M, hd) f32
        v = qkv[:, 2 * C + h * hd:2 * C + (h + 1) * hd]      # (M, hd) f32
        # q @ k^T via contraction of last dims (no materialized transpose);
        # tiny matmuls stay f32 -> fewer bf16 casts (helps v5e most).
        s = lax.dot_general(q, k, (((1,), (1,)), ((), ())),
                            preferred_element_type=jnp.float32)        # (M, M)
        s = s + bias
        s = s - jnp.max(s, axis=-1, keepdims=True)
        p = jnp.exp(s)
        p = p * pl.reciprocal(jnp.sum(p, axis=-1, keepdims=True), approx=True)
        y = jnp.dot(p, v, preferred_element_type=jnp.float32)          # (M, hd)
        att = att + jnp.dot(y.astype(jnp.bfloat16), wproj_ref[h],
                            preferred_element_type=jnp.float32)        # (M, C)
    x = x + att + bproj_ref[0]

    # ---------------- MLP branch ----------------
    h2 = _layer_norm(x, ln2_w_ref[0], ln2_b_ref[0])
    f = jnp.dot(h2.astype(jnp.bfloat16), wfc_ref[...],
                preferred_element_type=jnp.float32) + bfc_ref[0]        # (M, 4C)
    f = _gelu_tanh(f)
    m = jnp.dot(f.astype(jnp.bfloat16), wfcp_ref[...],
                preferred_element_type=jnp.float32) + bfcp_ref[0]       # (M, C)

    o_ref[0] = (x + m).astype(o_ref.dtype)


# --------------------------------- wrapper ------------------------------------

def _grid_steps(batch):
    """Grid steps over the batch.

    1 on single-TensorCore chips (v5e/v6e): no per-step pipeline overhead.
    2 on chips with 2 TensorCores per JAX device (v7x / megacore v4/v5p): the
    "parallel" grid axis gives each core half the batch.
    """
    if batch < 2 or batch % 2 != 0:
        return 1
    kind = ""
    try:
        kind = jax.devices()[0].device_kind.lower()
    except Exception:
        pass
    return 2 if any(t in kind for t in ("v7", "7x", "v4", "v5p")) else 1


def block_forward(x, params, n_head, *, io_dtype=jnp.bfloat16,
                  mxu_dtype=jnp.bfloat16):
    """x: (B, T, C) float32.  params: dict of weights laid out as (in, out).

    Returns (B, T, C) in io_dtype (bf16 I/O halves HBM traffic; internal
    LN / softmax / GELU math is f32, matmuls accumulate in f32)."""
    B, T, C = x.shape
    hd = C // n_head
    G = _grid_steps(B)
    Bb = B // G
    M = Bb * T            # rows of every 2-D matmul inside one grid step

    # Each grid step owns a contiguous (M, C) row slab (row-major, free reshape).
    x3 = x.astype(io_dtype).reshape(G, M, C)

    # Block-diagonal causal bias: token i may attend token j iff same batch
    # element and j <= i.  Built once on host; grid-invariant kernel input.
    tok = np.arange(M)
    allow = ((tok[:, None] // T) == (tok[None, :] // T)) & \
            ((tok[None, :] % T) <= (tok[:, None] % T))
    attn_bias = jnp.asarray(np.where(allow, 0.0, -1e30), dtype=jnp.float32)

    # Fused QKV weight with the softmax scale folded into the q columns.
    scale = 1.0 / math.sqrt(hd)
    col_scale = jnp.concatenate(
        [jnp.full((C,), scale, jnp.float32), jnp.ones((2 * C,), jnp.float32)])
    wqkv = (params["w_attn"] * col_scale[None, :]).astype(mxu_dtype)    # (C, 3C)
    bqkv = (params["b_attn"] * col_scale[None, :]).astype(jnp.float32)  # (1, 3C)

    # Output projection, head-major rows: (n_head, hd, C).
    wproj = params["w_proj"].reshape(n_head, hd, C).astype(mxu_dtype)

    param_list = [
        attn_bias,
        params["ln1_w"].astype(jnp.float32), params["ln1_b"].astype(jnp.float32),
        wqkv, bqkv,
        wproj, params["b_proj"].astype(jnp.float32),
        params["ln2_w"].astype(jnp.float32), params["ln2_b"].astype(jnp.float32),
        params["w_fc"].astype(mxu_dtype), params["b_fc"].astype(jnp.float32),
        params["w_fcp"].astype(mxu_dtype), params["b_fcp"].astype(jnp.float32),
    ]

    # Grid-invariant weights / biases / mask: whole array resident in VMEM,
    # unblocked -> single copy, no double-buffering (Buffered(1) intent).
    weight_specs = [pl.BlockSpec(memory_space=pltpu.MemorySpace.VMEM)
                    for _ in param_list]
    in_specs = [pl.BlockSpec((1, M, C), lambda g: (g, 0, 0))] + weight_specs

    kernel = functools.partial(block_kernel, n_head=n_head)

    out = pl.pallas_call(
        kernel,
        out_shape=jax.ShapeDtypeStruct((G, M, C), io_dtype),
        grid_spec=pltpu.PrefetchScalarGridSpec(
            num_scalar_prefetch=0,
            grid=(G,),
            in_specs=in_specs,
            out_specs=pl.BlockSpec((1, M, C), lambda g: (g, 0, 0)),
        ),
        compiler_params=pltpu.CompilerParams(
            dimension_semantics=("parallel",),
            # Tiny working set; 32 MiB stays well inside v7x's 64 MiB VMEM.
            vmem_limit_bytes=32 * 1024 * 1024,
        ),
    )(x3, *param_list)
    # Note: for production shapes keep C (and hd) multiples of 128 (lane-dense
    # stores), tile MLP/QKV N/K dims to 256 on v6e/v7x, and tile T flash-style.
    return out.reshape(B, T, C)


# ------------------------------ pure-JAX reference ----------------------------

def block_reference(x, params, n_head):
    B, T, C = x.shape
    hd = C // n_head

    def ln(v, w, b):
        mu = v.mean(-1, keepdims=True)
        var = ((v - mu) ** 2).mean(-1, keepdims=True)
        return (v - mu) / jnp.sqrt(var + 1e-5) * w[0] + b[0]

    h = ln(x, params["ln1_w"], params["ln1_b"])
    qkv = h @ params["w_attn"] + params["b_attn"][0]
    q, k, v = jnp.split(qkv, 3, axis=-1)
    q = q.reshape(B, T, n_head, hd).transpose(0, 2, 1, 3)
    k = k.reshape(B, T, n_head, hd).transpose(0, 2, 1, 3)
    v = v.reshape(B, T, n_head, hd).transpose(0, 2, 1, 3)
    s = jnp.einsum("bhtd,bhsd->bhts", q, k) / math.sqrt(hd)
    mask = jnp.tril(jnp.ones((T, T), bool))
    s = jnp.where(mask[None, None], s, -jnp.inf)
    p = jax.nn.softmax(s, axis=-1)
    y = jnp.einsum("bhts,bhsd->bhtd", p, v).transpose(0, 2, 1, 3).reshape(B, T, C)
    y = y @ params["w_proj"] + params["b_proj"][0]
    x = x + y

    h2 = ln(x, params["ln2_w"], params["ln2_b"])
    f = h2 @ params["w_fc"] + params["b_fc"][0]
    c = math.sqrt(2.0 / math.pi)
    f = 0.5 * f * (1.0 + jnp.tanh(c * (f + 0.044715 * f ** 3)))
    m = f @ params["w_fcp"] + params["b_fcp"][0]
    return x + m


# ----------------------------------- main --------------------------------------

if __name__ == "__main__":
    B, T = 2, 8            # block_size = 8
    n_embd, n_head = 32, 4

    key = jax.random.PRNGKey(0)
    ks = jax.random.split(key, 8)

    # deterministic synthetic parameters (GPT-2-ish init), stored as (in, out)
    params = {
        "ln1_w": jnp.ones((1, n_embd), jnp.float32),
        "ln1_b": jnp.zeros((1, n_embd), jnp.float32),
        "w_attn": 0.02 * jax.random.normal(ks[0], (n_embd, 3 * n_embd), jnp.float32),
        "b_attn": 0.01 * jax.random.normal(ks[1], (1, 3 * n_embd), jnp.float32),
        "w_proj": 0.02 * jax.random.normal(ks[2], (n_embd, n_embd), jnp.float32),
        "b_proj": 0.01 * jax.random.normal(ks[3], (1, n_embd), jnp.float32),
        "ln2_w": jnp.ones((1, n_embd), jnp.float32),
        "ln2_b": jnp.zeros((1, n_embd), jnp.float32),
        "w_fc": 0.02 * jax.random.normal(ks[4], (n_embd, 4 * n_embd), jnp.float32),
        "b_fc": 0.01 * jax.random.normal(ks[5], (1, 4 * n_embd), jnp.float32),
        "w_fcp": 0.02 * jax.random.normal(ks[6], (4 * n_embd, n_embd), jnp.float32),
        "b_fcp": 0.01 * jax.random.normal(ks[7], (1, n_embd), jnp.float32),
    }

    x = jax.random.normal(jax.random.PRNGKey(42), (B, T, n_embd), jnp.float32)

    out = block_forward(x, params, n_head)
    out = jax.block_until_ready(out)

    ref = jax.block_until_ready(block_reference(x, params, n_head))
    # bf16 activation I/O + bf16 MXU operands (f32 accumulation) + approx
    # softmax reciprocal -> loosened tolerance vs. the f32 reference.
    np.testing.assert_allclose(np.asarray(out).astype(np.float32),
                               np.asarray(ref), rtol=2e-2, atol=2e-2)

    print("KERNEL_OK")
</pallas_src>

<mosaic_0001>
module attributes {stable_mosaic.version = 11 : i64} {
  func.func @block_kernel(%arg0: i32, %arg1: memref<1x16x32xbf16, #tpu.memory_space<vmem>>, %arg2: memref<16x16xf32, #tpu.memory_space<vmem>>, %arg3: memref<1x32xf32, #tpu.memory_space<vmem>>, %arg4: memref<1x32xf32, #tpu.memory_space<vmem>>, %arg5: memref<32x96xbf16, #tpu.memory_space<vmem>>, %arg6: memref<1x96xf32, #tpu.memory_space<vmem>>, %arg7: memref<4x8x32xbf16, #tpu.memory_space<vmem>>, %arg8: memref<1x32xf32, #tpu.memory_space<vmem>>, %arg9: memref<1x32xf32, #tpu.memory_space<vmem>>, %arg10: memref<1x32xf32, #tpu.memory_space<vmem>>, %arg11: memref<32x128xbf16, #tpu.memory_space<vmem>>, %arg12: memref<1x128xf32, #tpu.memory_space<vmem>>, %arg13: memref<128x32xbf16, #tpu.memory_space<vmem>>, %arg14: memref<1x32xf32, #tpu.memory_space<vmem>>, %arg15: memref<1x16x32xbf16, #tpu.memory_space<vmem>>) attributes {dimension_semantics = [#tpu.dimension_semantics<parallel>], iteration_bounds = array<i64: 1>, scalar_prefetch = 0 : i64, scratch_operands = 0 : i64, tpu.core_type = #tpu.core_type<tc>, window_params = [{transform_indices = @transform_0, window_bounds = array<i64: 1, 16, 32>}, {pipeline_mode = #tpu.pipeline_mode<synchronous>, transform_indices = @transform_1, window_bounds = array<i64: 16, 16>}, {pipeline_mode = #tpu.pipeline_mode<synchronous>, transform_indices = @transform_2, window_bounds = array<i64: 1, 32>}, {pipeline_mode = #tpu.pipeline_mode<synchronous>, transform_indices = @transform_3, window_bounds = array<i64: 1, 32>}, {pipeline_mode = #tpu.pipeline_mode<synchronous>, transform_indices = @transform_4, window_bounds = array<i64: 32, 96>}, {pipeline_mode = #tpu.pipeline_mode<synchronous>, transform_indices = @transform_5, window_bounds = array<i64: 1, 96>}, {pipeline_mode = #tpu.pipeline_mode<synchronous>, transform_indices = @transform_6, window_bounds = array<i64: 4, 8, 32>}, {pipeline_mode = #tpu.pipeline_mode<synchronous>, transform_indices = @transform_7, window_bounds = array<i64: 1, 32>}, {pipeline_mode = #tpu.pipeline_mode<synchronous>, transform_indices = @transform_8, window_bounds = array<i64: 1, 32>}, {pipeline_mode = #tpu.pipeline_mode<synchronous>, transform_indices = @transform_9, window_bounds = array<i64: 1, 32>}, {pipeline_mode = #tpu.pipeline_mode<synchronous>, transform_indices = @transform_10, window_bounds = array<i64: 32, 128>}, {pipeline_mode = #tpu.pipeline_mode<synchronous>, transform_indices = @transform_11, window_bounds = array<i64: 1, 128>}, {pipeline_mode = #tpu.pipeline_mode<synchronous>, transform_indices = @transform_12, window_bounds = array<i64: 128, 32>}, {pipeline_mode = #tpu.pipeline_mode<synchronous>, transform_indices = @transform_13, window_bounds = array<i64: 1, 32>}, {transform_indices = @transform_14, window_bounds = array<i64: 1, 16, 32>}]} {
    %c0 = arith.constant 0 : index
    %c0_0 = arith.constant 0 : index
    %c0_1 = arith.constant 0 : index
    %0 = vector.load %arg1[%c0, %c0_0, %c0_1] : memref<1x16x32xbf16, #tpu.memory_space<vmem>>, vector<1x16x32xbf16>
    %1 = vector.shape_cast %0 : vector<1x16x32xbf16> to vector<16x32xbf16>
    %2 = arith.extf %1 : vector<16x32xbf16> to vector<16x32xf32>
    %c0_2 = arith.constant 0 : index
    %c0_3 = arith.constant 0 : index
    %3 = vector.load %arg3[%c0_2, %c0_3] : memref<1x32xf32, #tpu.memory_space<vmem>>, vector<1x32xf32>
    %4 = vector.shape_cast %3 : vector<1x32xf32> to vector<32xf32>
    %c0_4 = arith.constant 0 : index
    %c0_5 = arith.constant 0 : index
    %5 = vector.load %arg4[%c0_4, %c0_5] : memref<1x32xf32, #tpu.memory_space<vmem>>, vector<1x32xf32>
    %6 = vector.shape_cast %5 : vector<1x32xf32> to vector<32xf32>
    %cst = arith.constant dense<0.000000e+00> : vector<16xf32>
    %7 = vector.multi_reduction <add>, %2, %cst [1] : vector<16x32xf32> to vector<16xf32>
    %8 = vector.shape_cast %7 : vector<16xf32> to vector<16x1xf32>
    %cst_6 = arith.constant 3.200000e+01 : f32
    %9 = vector.broadcast %cst_6 : f32 to vector<16x1xf32>
    %10 = arith.divf %8, %9 : vector<16x1xf32>
    %11 = vector.broadcast %10 : vector<16x1xf32> to vector<16x32xf32>
    %12 = arith.subf %2, %11 : vector<16x32xf32>
    %13 = arith.mulf %12, %12 : vector<16x32xf32>
    %cst_7 = arith.constant dense<0.000000e+00> : vector<16xf32>
    %14 = vector.multi_reduction <add>, %13, %cst_7 [1] : vector<16x32xf32> to vector<16xf32>
    %15 = vector.shape_cast %14 : vector<16xf32> to vector<16x1xf32>
    %cst_8 = arith.constant 3.200000e+01 : f32
    %16 = vector.broadcast %cst_8 : f32 to vector<16x1xf32>
    %17 = arith.divf %15, %16 : vector<16x1xf32>
    %18 = vector.broadcast %10 : vector<16x1xf32> to vector<16x32xf32>
    %19 = arith.subf %2, %18 : vector<16x32xf32>
    %cst_9 = arith.constant 9.99999974E-6 : f32
    %20 = vector.broadcast %cst_9 : f32 to vector<16x1xf32>
    %21 = arith.addf %17, %20 : vector<16x1xf32>
    %22 = math.rsqrt %21 : vector<16x1xf32>
    %23 = vector.broadcast %22 : vector<16x1xf32> to vector<16x32xf32>
    %24 = arith.mulf %19, %23 : vector<16x32xf32>
    %25 = vector.shape_cast %4 : vector<32xf32> to vector<1x32xf32>
    %26 = vector.broadcast %25 : vector<1x32xf32> to vector<16x32xf32>
    %27 = arith.mulf %24, %26 : vector<16x32xf32>
    %28 = vector.shape_cast %6 : vector<32xf32> to vector<1x32xf32>
    %29 = vector.broadcast %28 : vector<1x32xf32> to vector<16x32xf32>
    %30 = arith.addf %27, %29 : vector<16x32xf32>
    %31 = arith.truncf %30 : vector<16x32xf32> to vector<16x32xbf16>
    %c0_10 = arith.constant 0 : index
    %c0_11 = arith.constant 0 : index
    %32 = vector.load %arg5[%c0_10, %c0_11] : memref<32x96xbf16, #tpu.memory_space<vmem>>, vector<32x96xbf16>
    %cst_12 = arith.constant dense<0.000000e+00> : vector<16x96xf32>
    %33 = tpu.matmul %31, %32, %cst_12 {dimension_numbers = #tpu.dot_dimension_numbers<[1], [0], [0], [1], [0, 0, 1, 1], [], []>} : vector<16x32xbf16>, vector<32x96xbf16>, vector<16x96xf32> -> vector<16x96xf32>
    %c0_13 = arith.constant 0 : index
    %c0_14 = arith.constant 0 : index
    %34 = vector.load %arg6[%c0_13, %c0_14] : memref<1x96xf32, #tpu.memory_space<vmem>>, vector<1x96xf32>
    %35 = vector.shape_cast %34 : vector<1x96xf32> to vector<96xf32>
    %36 = vector.shape_cast %35 : vector<96xf32> to vector<1x96xf32>
    %37 = vector.broadcast %36 : vector<1x96xf32> to vector<16x96xf32>
    %38 = arith.addf %33, %37 : vector<16x96xf32>
    %c0_15 = arith.constant 0 : index
    %c0_16 = arith.constant 0 : index
    %39 = vector.load %arg2[%c0_15, %c0_16] : memref<16x16xf32, #tpu.memory_space<vmem>>, vector<16x16xf32>
    %cst_17 = arith.constant 0.000000e+00 : f32
    %40 = vector.broadcast %cst_17 : f32 to vector<16x32xf32>
    %41 = vector.extract_strided_slice %38 {offsets = [0, 0], sizes = [16, 8], strides = [1, 1]} : vector<16x96xf32> to vector<16x8xf32>
    %42 = vector.extract_strided_slice %38 {offsets = [0, 32], sizes = [16, 8], strides = [1, 1]} : vector<16x96xf32> to vector<16x8xf32>
    %43 = vector.extract_strided_slice %38 {offsets = [0, 64], sizes = [16, 8], strides = [1, 1]} : vector<16x96xf32> to vector<16x8xf32>
    %cst_18 = arith.constant dense<0.000000e+00> : vector<16x16xf32>
    %44 = tpu.matmul %41, %42, %cst_18 {dimension_numbers = #tpu.dot_dimension_numbers<[1], [1], [0], [0], [0, 0, 1, 0], [], []>} : vector<16x8xf32>, vector<16x8xf32>, vector<16x16xf32> -> vector<16x16xf32>
    %45 = arith.addf %44, %39 : vector<16x16xf32>
    %cst_19 = arith.constant dense<0xFF800000> : vector<16xf32>
    %46 = vector.multi_reduction <maximumf>, %45, %cst_19 [1] : vector<16x16xf32> to vector<16xf32>
    %47 = vector.shape_cast %46 : vector<16xf32> to vector<16x1xf32>
    %48 = vector.broadcast %47 : vector<16x1xf32> to vector<16x16xf32>
    %49 = arith.subf %45, %48 : vector<16x16xf32>
    %50 = math.exp %49 : vector<16x16xf32>
    %cst_20 = arith.constant dense<0.000000e+00> : vector<16xf32>
    %51 = vector.multi_reduction <add>, %50, %cst_20 [1] : vector<16x16xf32> to vector<16xf32>
    %52 = vector.shape_cast %51 : vector<16xf32> to vector<16x1xf32>
    %53 = tpu.reciprocal %52 {approx = true} : vector<16x1xf32> -> vector<16x1xf32>
    %54 = vector.broadcast %53 : vector<16x1xf32> to vector<16x16xf32>
    %55 = arith.mulf %50, %54 : vector<16x16xf32>
    %cst_21 = arith.constant dense<0.000000e+00> : vector<16x8xf32>
    %56 = tpu.matmul %55, %43, %cst_21 {dimension_numbers = #tpu.dot_dimension_numbers<[1], [0], [0], [1], [0, 0, 1, 1], [], []>} : vector<16x16xf32>, vector<16x8xf32>, vector<16x8xf32> -> vector<16x8xf32>
    %57 = arith.truncf %56 : vector<16x8xf32> to vector<16x8xbf16>
    %c0_22 = arith.constant 0 : index
    %c0_23 = arith.constant 0 : index
    %c0_24 = arith.constant 0 : index
    %58 = vector.load %arg7[%c0_22, %c0_23, %c0_24] : memref<4x8x32xbf16, #tpu.memory_space<vmem>>, vector<1x8x32xbf16>
    %59 = vector.shape_cast %58 : vector<1x8x32xbf16> to vector<8x32xbf16>
    %cst_25 = arith.constant dense<0.000000e+00> : vector<16x32xf32>
    %60 = tpu.matmul %57, %59, %cst_25 {dimension_numbers = #tpu.dot_dimension_numbers<[1], [0], [0], [1], [0, 0, 1, 1], [], []>} : vector<16x8xbf16>, vector<8x32xbf16>, vector<16x32xf32> -> vector<16x32xf32>
    %61 = arith.addf %40, %60 : vector<16x32xf32>
    %62 = vector.extract_strided_slice %38 {offsets = [0, 8], sizes = [16, 8], strides = [1, 1]} : vector<16x96xf32> to vector<16x8xf32>
    %63 = vector.extract_strided_slice %38 {offsets = [0, 40], sizes = [16, 8], strides = [1, 1]} : vector<16x96xf32> to vector<16x8xf32>
    %64 = vector.extract_strided_slice %38 {offsets = [0, 72], sizes = [16, 8], strides = [1, 1]} : vector<16x96xf32> to vector<16x8xf32>
    %cst_26 = arith.constant dense<0.000000e+00> : vector<16x16xf32>
    %65 = tpu.matmul %62, %63, %cst_26 {dimension_numbers = #tpu.dot_dimension_numbers<[1], [1], [0], [0], [0, 0, 1, 0], [], []>} : vector<16x8xf32>, vector<16x8xf32>, vector<16x16xf32> -> vector<16x16xf32>
    %66 = arith.addf %65, %39 : vector<16x16xf32>
    %cst_27 = arith.constant dense<0xFF800000> : vector<16xf32>
    %67 = vector.multi_reduction <maximumf>, %66, %cst_27 [1] : vector<16x16xf32> to vector<16xf32>
    %68 = vector.shape_cast %67 : vector<16xf32> to vector<16x1xf32>
    %69 = vector.broadcast %68 : vector<16x1xf32> to vector<16x16xf32>
    %70 = arith.subf %66, %69 : vector<16x16xf32>
    %71 = math.exp %70 : vector<16x16xf32>
    %cst_28 = arith.constant dense<0.000000e+00> : vector<16xf32>
    %72 = vector.multi_reduction <add>, %71, %cst_28 [1] : vector<16x16xf32> to vector<16xf32>
    %73 = vector.shape_cast %72 : vector<16xf32> to vector<16x1xf32>
    %74 = tpu.reciprocal %73 {approx = true} : vector<16x1xf32> -> vector<16x1xf32>
    %75 = vector.broadcast %74 : vector<16x1xf32> to vector<16x16xf32>
    %76 = arith.mulf %71, %75 : vector<16x16xf32>
    %cst_29 = arith.constant dense<0.000000e+00> : vector<16x8xf32>
    %77 = tpu.matmul %76, %64, %cst_29 {dimension_numbers = #tpu.dot_dimension_numbers<[1], [0], [0], [1], [0, 0, 1, 1], [], []>} : vector<16x16xf32>, vector<16x8xf32>, vector<16x8xf32> -> vector<16x8xf32>
    %78 = arith.truncf %77 : vector<16x8xf32> to vector<16x8xbf16>
    %c1 = arith.constant 1 : index
    %c0_30 = arith.constant 0 : index
    %c0_31 = arith.constant 0 : index
    %79 = vector.load %arg7[%c1, %c0_30, %c0_31] : memref<4x8x32xbf16, #tpu.memory_space<vmem>>, vector<1x8x32xbf16>
    %80 = vector.shape_cast %79 : vector<1x8x32xbf16> to vector<8x32xbf16>
    %cst_32 = arith.constant dense<0.000000e+00> : vector<16x32xf32>
    %81 = tpu.matmul %78, %80, %cst_32 {dimension_numbers = #tpu.dot_dimension_numbers<[1], [0], [0], [1], [0, 0, 1, 1], [], []>} : vector<16x8xbf16>, vector<8x32xbf16>, vector<16x32xf32> -> vector<16x32xf32>
    %82 = arith.addf %61, %81 : vector<16x32xf32>
    %83 = vector.extract_strided_slice %38 {offsets = [0, 16], sizes = [16, 8], strides = [1, 1]} : vector<16x96xf32> to vector<16x8xf32>
    %84 = vector.extract_strided_slice %38 {offsets = [0, 48], sizes = [16, 8], strides = [1, 1]} : vector<16x96xf32> to vector<16x8xf32>
    %85 = vector.extract_strided_slice %38 {offsets = [0, 80], sizes = [16, 8], strides = [1, 1]} : vector<16x96xf32> to vector<16x8xf32>
    %cst_33 = arith.constant dense<0.000000e+00> : vector<16x16xf32>
    %86 = tpu.matmul %83, %84, %cst_33 {dimension_numbers = #tpu.dot_dimension_numbers<[1], [1], [0], [0], [0, 0, 1, 0], [], []>} : vector<16x8xf32>, vector<16x8xf32>, vector<16x16xf32> -> vector<16x16xf32>
    %87 = arith.addf %86, %39 : vector<16x16xf32>
    %cst_34 = arith.constant dense<0xFF800000> : vector<16xf32>
    %88 = vector.multi_reduction <maximumf>, %87, %cst_34 [1] : vector<16x16xf32> to vector<16xf32>
    %89 = vector.shape_cast %88 : vector<16xf32> to vector<16x1xf32>
    %90 = vector.broadcast %89 : vector<16x1xf32> to vector<16x16xf32>
    %91 = arith.subf %87, %90 : vector<16x16xf32>
    %92 = math.exp %91 : vector<16x16xf32>
    %cst_35 = arith.constant dense<0.000000e+00> : vector<16xf32>
    %93 = vector.multi_reduction <add>, %92, %cst_35 [1] : vector<16x16xf32> to vector<16xf32>
    %94 = vector.shape_cast %93 : vector<16xf32> to vector<16x1xf32>
    %95 = tpu.reciprocal %94 {approx = true} : vector<16x1xf32> -> vector<16x1xf32>
    %96 = vector.broadcast %95 : vector<16x1xf32> to vector<16x16xf32>
    %97 = arith.mulf %92, %96 : vector<16x16xf32>
    %cst_36 = arith.constant dense<0.000000e+00> : vector<16x8xf32>
    %98 = tpu.matmul %97, %85, %cst_36 {dimension_numbers = #tpu.dot_dimension_numbers<[1], [0], [0], [1], [0, 0, 1, 1], [], []>} : vector<16x16xf32>, vector<16x8xf32>, vector<16x8xf32> -> vector<16x8xf32>
    %99 = arith.truncf %98 : vector<16x8xf32> to vector<16x8xbf16>
    %c2 = arith.constant 2 : index
    %c0_37 = arith.constant 0 : index
    %c0_38 = arith.constant 0 : index
    %100 = vector.load %arg7[%c2, %c0_37, %c0_38] : memref<4x8x32xbf16, #tpu.memory_space<vmem>>, vector<1x8x32xbf16>
    %101 = vector.shape_cast %100 : vector<1x8x32xbf16> to vector<8x32xbf16>
    %cst_39 = arith.constant dense<0.000000e+00> : vector<16x32xf32>
    %102 = tpu.matmul %99, %101, %cst_39 {dimension_numbers = #tpu.dot_dimension_numbers<[1], [0], [0], [1], [0, 0, 1, 1], [], []>} : vector<16x8xbf16>, vector<8x32xbf16>, vector<16x32xf32> -> vector<16x32xf32>
    %103 = arith.addf %82, %102 : vector<16x32xf32>
    %104 = vector.extract_strided_slice %38 {offsets = [0, 24], sizes = [16, 8], strides = [1, 1]} : vector<16x96xf32> to vector<16x8xf32>
    %105 = vector.extract_strided_slice %38 {offsets = [0, 56], sizes = [16, 8], strides = [1, 1]} : vector<16x96xf32> to vector<16x8xf32>
    %106 = vector.extract_strided_slice %38 {offsets = [0, 88], sizes = [16, 8], strides = [1, 1]} : vector<16x96xf32> to vector<16x8xf32>
    %cst_40 = arith.constant dense<0.000000e+00> : vector<16x16xf32>
    %107 = tpu.matmul %104, %105, %cst_40 {dimension_numbers = #tpu.dot_dimension_numbers<[1], [1], [0], [0], [0, 0, 1, 0], [], []>} : vector<16x8xf32>, vector<16x8xf32>, vector<16x16xf32> -> vector<16x16xf32>
    %108 = arith.addf %107, %39 : vector<16x16xf32>
    %cst_41 = arith.constant dense<0xFF800000> : vector<16xf32>
    %109 = vector.multi_reduction <maximumf>, %108, %cst_41 [1] : vector<16x16xf32> to vector<16xf32>
    %110 = vector.shape_cast %109 : vector<16xf32> to vector<16x1xf32>
    %111 = vector.broadcast %110 : vector<16x1xf32> to vector<16x16xf32>
    %112 = arith.subf %108, %111 : vector<16x16xf32>
    %113 = math.exp %112 : vector<16x16xf32>
    %cst_42 = arith.constant dense<0.000000e+00> : vector<16xf32>
    %114 = vector.multi_reduction <add>, %113, %cst_42 [1] : vector<16x16xf32> to vector<16xf32>
    %115 = vector.shape_cast %114 : vector<16xf32> to vector<16x1xf32>
    %116 = tpu.reciprocal %115 {approx = true} : vector<16x1xf32> -> vector<16x1xf32>
    %117 = vector.broadcast %116 : vector<16x1xf32> to vector<16x16xf32>
    %118 = arith.mulf %113, %117 : vector<16x16xf32>
    %cst_43 = arith.constant dense<0.000000e+00> : vector<16x8xf32>
    %119 = tpu.matmul %118, %106, %cst_43 {dimension_numbers = #tpu.dot_dimension_numbers<[1], [0], [0], [1], [0, 0, 1, 1], [], []>} : vector<16x16xf32>, vector<16x8xf32>, vector<16x8xf32> -> vector<16x8xf32>
    %120 = arith.truncf %119 : vector<16x8xf32> to vector<16x8xbf16>
    %c3 = arith.constant 3 : index
    %c0_44 = arith.constant 0 : index
    %c0_45 = arith.constant 0 : index
    %121 = vector.load %arg7[%c3, %c0_44, %c0_45] : memref<4x8x32xbf16, #tpu.memory_space<vmem>>, vector<1x8x32xbf16>
    %122 = vector.shape_cast %121 : vector<1x8x32xbf16> to vector<8x32xbf16>
    %cst_46 = arith.constant dense<0.000000e+00> : vector<16x32xf32>
    %123 = tpu.matmul %120, %122, %cst_46 {dimension_numbers = #tpu.dot_dimension_numbers<[1], [0], [0], [1], [0, 0, 1, 1], [], []>} : vector<16x8xbf16>, vector<8x32xbf16>, vector<16x32xf32> -> vector<16x32xf32>
    %124 = arith.addf %103, %123 : vector<16x32xf32>
    %125 = arith.addf %2, %124 : vector<16x32xf32>
    %c0_47 = arith.constant 0 : index
    %c0_48 = arith.constant 0 : index
    %126 = vector.load %arg8[%c0_47, %c0_48] : memref<1x32xf32, #tpu.memory_space<vmem>>, vector<1x32xf32>
    %127 = vector.shape_cast %126 : vector<1x32xf32> to vector<32xf32>
    %128 = vector.shape_cast %127 : vector<32xf32> to vector<1x32xf32>
    %129 = vector.broadcast %128 : vector<1x32xf32> to vector<16x32xf32>
    %130 = arith.addf %125, %129 : vector<16x32xf32>
    %c0_49 = arith.constant 0 : index
    %c0_50 = arith.constant 0 : index
    %131 = vector.load %arg9[%c0_49, %c0_50] : memref<1x32xf32, #tpu.memory_space<vmem>>, vector<1x32xf32>
    %132 = vector.shape_cast %131 : vector<1x32xf32> to vector<32xf32>
    %c0_51 = arith.constant 0 : index
    %c0_52 = arith.constant 0 : index
    %133 = vector.load %arg10[%c0_51, %c0_52] : memref<1x32xf32, #tpu.memory_space<vmem>>, vector<1x32xf32>
    %134 = vector.shape_cast %133 : vector<1x32xf32> to vector<32xf32>
    %cst_53 = arith.constant dense<0.000000e+00> : vector<16xf32>
    %135 = vector.multi_reduction <add>, %130, %cst_53 [1] : vector<16x32xf32> to vector<16xf32>
    %136 = vector.shape_cast %135 : vector<16xf32> to vector<16x1xf32>
    %cst_54 = arith.constant 3.200000e+01 : f32
    %137 = vector.broadcast %cst_54 : f32 to vector<16x1xf32>
    %138 = arith.divf %136, %137 : vector<16x1xf32>
    %139 = vector.broadcast %138 : vector<16x1xf32> to vector<16x32xf32>
    %140 = arith.subf %130, %139 : vector<16x32xf32>
    %141 = arith.mulf %140, %140 : vector<16x32xf32>
    %cst_55 = arith.constant dense<0.000000e+00> : vector<16xf32>
    %142 = vector.multi_reduction <add>, %141, %cst_55 [1] : vector<16x32xf32> to vector<16xf32>
    %143 = vector.shape_cast %142 : vector<16xf32> to vector<16x1xf32>
    %cst_56 = arith.constant 3.200000e+01 : f32
    %144 = vector.broadcast %cst_56 : f32 to vector<16x1xf32>
    %145 = arith.divf %143, %144 : vector<16x1xf32>
    %146 = vector.broadcast %138 : vector<16x1xf32> to vector<16x32xf32>
    %147 = arith.subf %130, %146 : vector<16x32xf32>
    %cst_57 = arith.constant 9.99999974E-6 : f32
    %148 = vector.broadcast %cst_57 : f32 to vector<16x1xf32>
    %149 = arith.addf %145, %148 : vector<16x1xf32>
    %150 = math.rsqrt %149 : vector<16x1xf32>
    %151 = vector.broadcast %150 : vector<16x1xf32> to vector<16x32xf32>
    %152 = arith.mulf %147, %151 : vector<16x32xf32>
    %153 = vector.shape_cast %132 : vector<32xf32> to vector<1x32xf32>
    %154 = vector.broadcast %153 : vector<1x32xf32> to vector<16x32xf32>
    %155 = arith.mulf %152, %154 : vector<16x32xf32>
    %156 = vector.shape_cast %134 : vector<32xf32> to vector<1x32xf32>
    %157 = vector.broadcast %156 : vector<1x32xf32> to vector<16x32xf32>
    %158 = arith.addf %155, %157 : vector<16x32xf32>
    %159 = arith.truncf %158 : vector<16x32xf32> to vector<16x32xbf16>
    %c0_58 = arith.constant 0 : index
    %c0_59 = arith.constant 0 : index
    %160 = vector.load %arg11[%c0_58, %c0_59] : memref<32x128xbf16, #tpu.memory_space<vmem>>, vector<32x128xbf16>
    %cst_60 = arith.constant dense<0.000000e+00> : vector<16x128xf32>
    %161 = tpu.matmul %159, %160, %cst_60 {dimension_numbers = #tpu.dot_dimension_numbers<[1], [0], [0], [1], [0, 0, 1, 1], [], []>} : vector<16x32xbf16>, vector<32x128xbf16>, vector<16x128xf32> -> vector<16x128xf32>
    %c0_61 = arith.constant 0 : index
    %c0_62 = arith.constant 0 : index
    %162 = vector.load %arg12[%c0_61, %c0_62] : memref<1x128xf32, #tpu.memory_space<vmem>>, vector<1x128xf32>
    %163 = vector.shape_cast %162 : vector<1x128xf32> to vector<128xf32>
    %164 = vector.shape_cast %163 : vector<128xf32> to vector<1x128xf32>
    %165 = vector.broadcast %164 : vector<1x128xf32> to vector<16x128xf32>
    %166 = arith.addf %161, %165 : vector<16x128xf32>
    %cst_63 = arith.constant 5.000000e-01 : f32
    %167 = vector.broadcast %cst_63 : f32 to vector<16x128xf32>
    %168 = arith.mulf %167, %166 : vector<16x128xf32>
    %cst_64 = arith.constant 4.471500e-02 : f32
    %169 = vector.broadcast %cst_64 : f32 to vector<16x128xf32>
    %170 = arith.mulf %169, %166 : vector<16x128xf32>
    %171 = arith.mulf %170, %166 : vector<16x128xf32>
    %172 = arith.mulf %171, %166 : vector<16x128xf32>
    %173 = arith.addf %166, %172 : vector<16x128xf32>
    %cst_65 = arith.constant 0.797884583 : f32
    %174 = vector.broadcast %cst_65 : f32 to vector<16x128xf32>
    %175 = arith.mulf %174, %173 : vector<16x128xf32>
    %176 = math.tanh %175 : vector<16x128xf32>
    %cst_66 = arith.constant 1.000000e+00 : f32
    %177 = vector.broadcast %cst_66 : f32 to vector<16x128xf32>
    %178 = arith.addf %177, %176 : vector<16x128xf32>
    %179 = arith.mulf %168, %178 : vector<16x128xf32>
    %180 = arith.truncf %179 : vector<16x128xf32> to vector<16x128xbf16>
    %c0_67 = arith.constant 0 : index
    %c0_68 = arith.constant 0 : index
    %181 = vector.load %arg13[%c0_67, %c0_68] : memref<128x32xbf16, #tpu.memory_space<vmem>>, vector<128x32xbf16>
    %cst_69 = arith.constant dense<0.000000e+00> : vector<16x32xf32>
    %182 = tpu.matmul %180, %181, %cst_69 {dimension_numbers = #tpu.dot_dimension_numbers<[1], [0], [0], [1], [0, 0, 1, 1], [], []>} : vector<16x128xbf16>, vector<128x32xbf16>, vector<16x32xf32> -> vector<16x32xf32>
    %c0_70 = arith.constant 0 : index
    %c0_71 = arith.constant 0 : index
    %183 = vector.load %arg14[%c0_70, %c0_71] : memref<1x32xf32, #tpu.memory_space<vmem>>, vector<1x32xf32>
    %184 = vector.shape_cast %183 : vector<1x32xf32> to vector<32xf32>
    %185 = vector.shape_cast %184 : vector<32xf32> to vector<1x32xf32>
    %186 = vector.broadcast %185 : vector<1x32xf32> to vector<16x32xf32>
    %187 = arith.addf %182, %186 : vector<16x32xf32>
    %188 = arith.addf %130, %187 : vector<16x32xf32>
    %189 = arith.truncf %188 : vector<16x32xf32> to vector<16x32xbf16>
    %c0_72 = arith.constant 0 : index
    %c0_73 = arith.constant 0 : index
    %c0_74 = arith.constant 0 : index
    %190 = vector.load %arg15[%c0_72, %c0_73, %c0_74] : memref<1x16x32xbf16, #tpu.memory_space<vmem>>, vector<1x16x32xbf16>
    %191 = vector.shape_cast %190 : vector<1x16x32xbf16> to vector<16x32xbf16>
    %192 = vector.shape_cast %189 : vector<16x32xbf16> to vector<1x16x32xbf16>
    tpu.vector_store %arg15[%c0_72, %c0_73, %c0_74], %192 {strides = array<i32>} : memref<1x16x32xbf16, #tpu.memory_space<vmem>>, vector<1x16x32xbf16>,
    return
  }
  func.func @transform_0(%arg0: i32) -> (i32, i32, i32) {
    %c0_i32 = arith.constant 0 : i32
    %c0_i32_0 = arith.constant 0 : i32
    %c0_i32_1 = arith.constant 0 : i32
    return %arg0, %c0_i32, %c0_i32_0 : i32, i32, i32
  }
  func.func @transform_1(%arg0: i32) -> (i32, i32) {
    %c0_i32 = arith.constant 0 : i32
    %c0_i32_0 = arith.constant 0 : i32
    %c0_i32_1 = arith.constant 0 : i32
    return %c0_i32, %c0_i32_0 : i32, i32
  }
  func.func @transform_2(%arg0: i32) -> (i32, i32) {
    %c0_i32 = arith.constant 0 : i32
    %c0_i32_0 = arith.constant 0 : i32
    %c0_i32_1 = arith.constant 0 : i32
    return %c0_i32, %c0_i32_0 : i32, i32
  }
  func.func @transform_3(%arg0: i32) -> (i32, i32) {
    %c0_i32 = arith.constant 0 : i32
    %c0_i32_0 = arith.constant 0 : i32
    %c0_i32_1 = arith.constant 0 : i32
    return %c0_i32, %c0_i32_0 : i32, i32
  }
  func.func @transform_4(%arg0: i32) -> (i32, i32) {
    %c0_i32 = arith.constant 0 : i32
    %c0_i32_0 = arith.constant 0 : i32
    %c0_i32_1 = arith.constant 0 : i32
    return %c0_i32, %c0_i32_0 : i32, i32
  }
  func.func @transform_5(%arg0: i32) -> (i32, i32) {
    %c0_i32 = arith.constant 0 : i32
    %c0_i32_0 = arith.constant 0 : i32
    %c0_i32_1 = arith.constant 0 : i32
    return %c0_i32, %c0_i32_0 : i32, i32
  }
  func.func @transform_6(%arg0: i32) -> (i32, i32, i32) {
    %c0_i32 = arith.constant 0 : i32
    %c0_i32_0 = arith.constant 0 : i32
    %c0_i32_1 = arith.constant 0 : i32
    %c0_i32_2 = arith.constant 0 : i32
    return %c0_i32, %c0_i32_0, %c0_i32_1 : i32, i32, i32
  }
  func.func @transform_7(%arg0: i32) -> (i32, i32) {
    %c0_i32 = arith.constant 0 : i32
    %c0_i32_0 = arith.constant 0 : i32
    %c0_i32_1 = arith.constant 0 : i32
    return %c0_i32, %c0_i32_0 : i32, i32
  }
  func.func @transform_8(%arg0: i32) -> (i32, i32) {
    %c0_i32 = arith.constant 0 : i32
    %c0_i32_0 = arith.constant 0 : i32
    %c0_i32_1 = arith.constant 0 : i32
    return %c0_i32, %c0_i32_0 : i32, i32
  }
  func.func @transform_9(%arg0: i32) -> (i32, i32) {
    %c0_i32 = arith.constant 0 : i32
    %c0_i32_0 = arith.constant 0 : i32
    %c0_i32_1 = arith.constant 0 : i32
    return %c0_i32, %c0_i32_0 : i32, i32
  }
  func.func @transform_10(%arg0: i32) -> (i32, i32) {
    %c0_i32 = arith.constant 0 : i32
    %c0_i32_0 = arith.constant 0 : i32
    %c0_i32_1 = arith.constant 0 : i32
    return %c0_i32, %c0_i32_0 : i32, i32
  }
  func.func @transform_11(%arg0: i32) -> (i32, i32) {
    %c0_i32 = arith.constant 0 : i32
    %c0_i32_0 = arith.constant 0 : i32
    %c0_i32_1 = arith.constant 0 : i32
    return %c0_i32, %c0_i32_0 : i32, i32
  }
  func.func @transform_12(%arg0: i32) -> (i32, i32) {
    %c0_i32 = arith.constant 0 : i32
    %c0_i32_0 = arith.constant 0 : i32
    %c0_i32_1 = arith.constant 0 : i32
    return %c0_i32, %c0_i32_0 : i32, i32
  }
  func.func @transform_13(%arg0: i32) -> (i32, i32) {
    %c0_i32 = arith.constant 0 : i32
    %c0_i32_0 = arith.constant 0 : i32
    %c0_i32_1 = arith.constant 0 : i32
    return %c0_i32, %c0_i32_0 : i32, i32
  }
  func.func @transform_14(%arg0: i32) -> (i32, i32, i32) {
    %c0_i32 = arith.constant 0 : i32
    %c0_i32_0 = arith.constant 0 : i32
    %c0_i32_1 = arith.constant 0 : i32
    return %arg0, %c0_i32, %c0_i32_0 : i32, i32, i32
  }
}

</mosaic_0001>

<llo_original>
// kernel: tpu_custom_call.1
$region0: #{tpu_custom_call.1}
  #allocation0 [shape = 'u32[]', space=smem, size = 0x4, offset = 0x4, fixed_abs, tag = 'smem constant byte address 0x4 - core index']
  #allocation1 [shape = 'u32[144,128]{1,0:T(1,128)}', space=vmem, size = 0x12000, scoped, tag = 'internal scratch']
  %s0 = inlined_call_operand.vmem [shape: bf16[1,16,32], index: 0, kind: input, shape index: {}]
  %s1 = inlined_call_operand.vmem [shape: f32[16,16], index: 1, kind: input, shape index: {}]
  %s2 = inlined_call_operand.vmem [shape: f32[1,32], index: 2, kind: input, shape index: {}]
  %s3 = inlined_call_operand.vmem [shape: f32[1,32], index: 3, kind: input, shape index: {}]
  %s4 = inlined_call_operand.vmem [shape: bf16[32,96], index: 4, kind: input, shape index: {}]
  %s5 = inlined_call_operand.vmem [shape: f32[1,96], index: 5, kind: input, shape index: {}]
  %s6 = inlined_call_operand.vmem [shape: bf16[4,8,32], index: 6, kind: input, shape index: {}]
  %s7 = inlined_call_operand.vmem [shape: f32[1,32], index: 7, kind: input, shape index: {}]
  %s8 = inlined_call_operand.vmem [shape: f32[1,32], index: 8, kind: input, shape index: {}]
  %s9 = inlined_call_operand.vmem [shape: f32[1,32], index: 9, kind: input, shape index: {}]
  %s10 = inlined_call_operand.vmem [shape: bf16[32,128], index: 10, kind: input, shape index: {}]
  %s11 = inlined_call_operand.vmem [shape: f32[1,128], index: 11, kind: input, shape index: {}]
  %s12 = inlined_call_operand.vmem [shape: bf16[128,32], index: 12, kind: input, shape index: {}]
  %s13 = inlined_call_operand.vmem [shape: f32[1,32], index: 13, kind: input, shape index: {}]
  %s14 = inlined_call_operand.hbm [shape: bf16[1,16,32], index: 14, kind: output, shape index: {}]
  %s15 = sld [smem:[#allocation0]]
  $region66: #{tpu_custom_call.1} parent=0
    _
  %s17 = ssub.s32 1, %s15
  %s18 = scalar_select 0, %s17, %s15
  $region1: #{tpu_custom_call.1} parent=0
    #allocation2 [shape = 'u8[4096]{0}', space=vmem, size = 0x1000, scoped, tag = 'output window, operand 0, single buffered']
    #allocation3 [shape = 's32[1]{0}', space=sflag, size = 0x4, scoped, tag = 'scoped memory for tpu_custom_call.1']
    %19 = vsyncpa [#allocation3], 0
    // Predicated region
    $region2: #{tpu_custom_call.1} parent=1 // pred_check
      _
    $region3: #{tpu_custom_call.1} parent=1 // pred_check_branch
      %21 = sbr.rel (0) target = $region5
    $region4: #{tpu_custom_call.1} parent=1 // pred_region
      _
    $region5: #{tpu_custom_call.1} parent=1 // pred_fallthru
      _
    // Predicated region
    $region6: #{tpu_custom_call.1} parent=1 // pred_check
      _
    $region7: #{tpu_custom_call.1} parent=1 // pred_check_branch
      %23 = sbr.rel (0) target = $region9
    $region8: #{tpu_custom_call.1} parent=1 // pred_region
      _
    $region9: #{tpu_custom_call.1} parent=1 // pred_fallthru
      _
    // Predicated region
    $region10: #{tpu_custom_call.1} parent=1 // pred_check
      _
    $region11: #{tpu_custom_call.1} parent=1 // pred_check_branch
      %25 = sbr.rel (0) target = $region13
    $region12: #{tpu_custom_call.1} parent=1 // pred_region
      _
    $region13: #{tpu_custom_call.1} parent=1 // pred_fallthru
      _
    // Predicated region
    $region14: #{tpu_custom_call.1} parent=1 // pred_check
      _
    $region15: #{tpu_custom_call.1} parent=1 // pred_check_branch
      %27 = sbr.rel (0) target = $region17
    $region16: #{tpu_custom_call.1} parent=1 // pred_region
      _
    $region17: #{tpu_custom_call.1} parent=1 // pred_fallthru
      _
    // Predicated region
    $region18: #{tpu_custom_call.1} parent=1 // pred_check
      _
    $region19: #{tpu_custom_call.1} parent=1 // pred_check_branch
      %29 = sbr.rel (0) target = $region21
    $region20: #{tpu_custom_call.1} parent=1 // pred_region
      _
    $region21: #{tpu_custom_call.1} parent=1 // pred_fallthru
      _
    // Predicated region
    $region22: #{tpu_custom_call.1} parent=1 // pred_check
      _
    $region23: #{tpu_custom_call.1} parent=1 // pred_check_branch
      %31 = sbr.rel (0) target = $region25
    $region24: #{tpu_custom_call.1} parent=1 // pred_region
      _
    $region25: #{tpu_custom_call.1} parent=1 // pred_fallthru
      _
    // Predicated region
    $region26: #{tpu_custom_call.1} parent=1 // pred_check
      _
    $region27: #{tpu_custom_call.1} parent=1 // pred_check_branch
      %33 = sbr.rel (0) target = $region29
    $region28: #{tpu_custom_call.1} parent=1 // pred_region
      _
    $region29: #{tpu_custom_call.1} parent=1 // pred_fallthru
      _
    // Predicated region
    $region30: #{tpu_custom_call.1} parent=1 // pred_check
      _
    $region31: #{tpu_custom_call.1} parent=1 // pred_check_branch
      %35 = sbr.rel (0) target = $region33
    $region32: #{tpu_custom_call.1} parent=1 // pred_region
      _
    $region33: #{tpu_custom_call.1} parent=1 // pred_fallthru
      _
    // Predicated region
    $region34: #{tpu_custom_call.1} parent=1 // pred_check
      _
    $region35: #{tpu_custom_call.1} parent=1 // pred_check_branch
      %37 = sbr.rel (0) target = $region37
    $region36: #{tpu_custom_call.1} parent=1 // pred_region
      _
    $region37: #{tpu_custom_call.1} parent=1 // pred_fallthru
      _
    // Predicated region
    $region38: #{tpu_custom_call.1} parent=1 // pred_check
      _
    $region39: #{tpu_custom_call.1} parent=1 // pred_check_branch
      %39 = sbr.rel (0) target = $region41
    $region40: #{tpu_custom_call.1} parent=1 // pred_region
      _
    $region41: #{tpu_custom_call.1} parent=1 // pred_fallthru
      _
    // Predicated region
    $region42: #{tpu_custom_call.1} parent=1 // pred_check
      _
    $region43: #{tpu_custom_call.1} parent=1 // pred_check_branch
      %41 = sbr.rel (0) target = $region45
    $region44: #{tpu_custom_call.1} parent=1 // pred_region
      _
    $region45: #{tpu_custom_call.1} parent=1 // pred_fallthru
      _
    // Predicated region
    $region46: #{tpu_custom_call.1} parent=1 // pred_check
      _
    $region47: #{tpu_custom_call.1} parent=1 // pred_check_branch
      %43 = sbr.rel (0) target = $region49
    $region48: #{tpu_custom_call.1} parent=1 // pred_region
      _
    $region49: #{tpu_custom_call.1} parent=1 // pred_fallthru
      _
    // Predicated region
    $region50: #{tpu_custom_call.1} parent=1 // pred_check
      _
    $region51: #{tpu_custom_call.1} parent=1 // pred_check_branch
      %45 = sbr.rel (0) target = $region53
    $region52: #{tpu_custom_call.1} parent=1 // pred_region
      _
    $region53: #{tpu_custom_call.1} parent=1 // pred_fallthru
      _
    // Predicated region
    $region54: #{tpu_custom_call.1} parent=1 // pred_check
      _
    $region55: #{tpu_custom_call.1} parent=1 // pred_check_branch
      %47 = sbr.rel (0) target = $region57
    $region56: #{tpu_custom_call.1} parent=1 // pred_region
      _
    $region57: #{tpu_custom_call.1} parent=1 // pred_fallthru
      _
    %v49 = vld [vmem:[%s0] sm:$0xf]
    %v50 = vld [vmem:[%s0 + $0x4] sm:$0xf]
    %v51 = vunpack.c.l.bf16 %v49
    %v52 = vunpack.c.l.bf16 %v50
    %v53 = vld [vmem:[%s2] sm:$0x1]
    %v54 = vld [vmem:[%s3] sm:$0x1]
    %vm55 = vcmask 261120
    %v56 = vsel %vm55, %v51, 0.0
    %57 = vadd.xlane.f32.xlu0 %v56
    %v58 = vpop.xlane.xlu0 %57
    %v59 = vsel %vm55, %v52, 0.0
    %60 = vadd.xlane.f32.xlu0 %v59
    %v61 = vpop.xlane.xlu0 %60
    %v62 = vrcp.pop 32.0
    %v63 = vmul.f32 %v58, %v62
    %v64 = vmul.f32 %v61, %v62
    %v65 = vsub.f32 %v51, %v63
    %v66 = vsub.f32 %v52, %v64
    %v67 = vmul.f32 %v65, %v65
    %v68 = vmul.f32 %v66, %v66
    %v69 = vsel %vm55, %v67, 0.0
    %70 = vadd.xlane.f32.xlu0 %v69
    %v71 = vpop.xlane.xlu0 %70
    %v72 = vsel %vm55, %v68, 0.0
    %73 = vadd.xlane.f32.xlu0 %v72
    %v74 = vpop.xlane.xlu0 %73
    %v75 = vmul.f32 %v71, %v62
    %v76 = vmul.f32 %v74, %v62
    %v77 = vadd.f32 %v75, 1e-05
    %v78 = vadd.f32 %v76, 1e-05
    %v79 = vrsqrt.pop %v77
    %v80 = vrsqrt.pop %v78
    %v81 = vmul.f32 %v65, %v79
    %v82 = vmul.f32 %v66, %v80
    %v84 = vlaneseq
    %v85 = vshrl.u32 %v84, 7
    %v86 = vsub.s32 0, %v85
    %v87 = vrot.slane %v53, %v86
    %v89 = vmul.f32 %v81, %v87
    %v90 = vmul.f32 %v82, %v87
    %v92 = vlaneseq
    %v93 = vshrl.u32 %v92, 7
    %v94 = vsub.s32 0, %v93
    %v95 = vrot.slane %v54, %v94
    %v97 = vadd.f32 %v89, %v95
    %v98 = vadd.f32 %v90, %v95
    %v99 = vpack.c.bf16 %v98, %v97
    %v100 = vld [vmem:[%s4] sm:$0xf]
    %v101 = vld [vmem:[%s4 + $0x4] sm:$0xf]
    %v102 = vld [vmem:[%s4 + $0x8] sm:$0xf]
    %v103 = vld [vmem:[%s4 + $0xc] sm:$0xf]
    %v104 = vld [vmem:[%s5] sm:$0x1]
    %v106 = vlaneseq
    %v107 = vshrl.u32 %v106, 7
    %v108 = vsub.s32 0, %v107
    %v109 = vrot.slane %v104, %v108
    %v115 = vunpack.c.l.b16 %v100
    %v116 = vunpack.c.l.b16 %v101
    %v117 = vunpack.c.l.b16 %v102
    %v118 = vunpack.c.l.b16 %v103
    %v119 = vpack.c.b16 %v116, %v115
    %v120 = vpack.c.b16 %v118, %v117
    %v124 = vsel %vm55, %v99, 0
    %126 = vmatprep.subr.bf16.mxu0 0
    %127 = vmatpush1.bf16.msra.mxu0 %v119
    %128 = vmatprep.subr.bf16.mxu0 0
    %129 = vmatpush1.bf16.msra.mxu0 %v120
    %130 = vmatprep.subr.bf16.mxu0 0
    %131 = vmatpush1.bf16.msra.mxu0 0
    %132 = vmatprep.subr.bf16.mxu0 0
    %133 = vmatpush1.bf16.msra.mxu0 0
    %134 = vmatprep.subr.bf16.mxu0 0
    %135 = vmatpush1.bf16.msra.mxu0 0
    %136 = vmatprep.subr.bf16.mxu0 0
    %137 = vmatpush1.bf16.msra.mxu0 0
    %138 = vmatprep.subr.bf16.mxu0 0
    %139 = vmatpush1.bf16.msra.mxu0 0
    %140 = vmatprep.subr.bf16.mxu0 0
    %141 = vmatpush1.bf16.msra.mxu0 0
    %142 = vmatprep.subr.bf16.mxu0 0
    %143 = vmatpush1.bf16.msra.mxu0 0
    %144 = vmatprep.subr.bf16.mxu0 0
    %145 = vmatpush1.bf16.msra.mxu0 0
    %146 = vmatprep.subr.bf16.mxu0 0
    %147 = vmatpush1.bf16.msra.mxu0 0
    %148 = vmatprep.subr.bf16.mxu0 0
    %149 = vmatpush1.bf16.msra.mxu0 0
    %150 = vmatprep.subr.bf16.mxu0 0
    %151 = vmatpush1.bf16.msra.mxu0 0
    %152 = vmatprep.subr.bf16.mxu0 0
    %153 = vmatpush1.bf16.msra.mxu0 0
    %154 = vmatprep.subr.bf16.mxu0 0
    %155 = vmatpush1.bf16.msra.mxu0 0
    %156 = vmatprep.subr.bf16.mxu0 0
    %157 = vmatpush1.bf16.msra.mxu0 0
    %158 = vmatprep.mubr.bf16.mxu0 0
    %159 = vmatmul.mubr.bf16.gmra.mrb[0].mxu0 %v124
    %v160 = vpop.f32.mrb[0].mxu0
    %v161 = vadd.f32 %v109, %v160
    %v162 = vpop.f32.mrb[0].mxu0
    %v163 = vpop.f32.mrb[0].mxu0
    %v164 = vadd.f32 %v109, %v163
    %v165 = vpop.f32.mrb[0].mxu0
    %166 = vdwg.mxu0
    %v167 = vld [vmem:[%s1] sm:$0xff]
    %v168 = vld [vmem:[%s1 + $0x8] sm:$0xff]
    %171 = vrot.lane.b32.xlu0 %v161, 96
    %v172 = vpop.permute.xlu0 %171
    %173 = vrot.lane.b32.xlu0 %v164, 96
    %v174 = vpop.permute.xlu0 %173
    %vm175 = vcmask 64512
    %v176 = vsel %vm175, %v161, 0
    %v178 = vsel %vm175, %v164, 0
    %v180 = vsel %vm175, %v172, 0
    %v182 = vsel %vm175, %v174, 0
    %184 = vmatprep.subr.mxu0 0.0
    %185 = vmatpush1.xpose.msra.mxu0 %v180
    %186 = vmatprep.subr.mxu0 0.0
    %187 = vmatpush1.xpose.msra.mxu0 %v182
    %188 = vmatprep.subr.mxu0 0.0
    %189 = vmatpush1.xpose.msra.mxu0 0.0
    %190 = vmatprep.subr.mxu0 0.0
    %191 = vmatpush1.xpose.msra.mxu0 0.0
    %192 = vmatprep.subr.mxu0 0.0
    %193 = vmatpush1.xpose.msra.mxu0 0.0
    %194 = vmatprep.subr.mxu0 0.0
    %195 = vmatpush1.xpose.msra.mxu0 0.0
    %196 = vmatprep.subr.mxu0 0.0
    %197 = vmatpush1.xpose.msra.mxu0 0.0
    %198 = vmatprep.subr.mxu0 0.0
    %199 = vmatpush1.xpose.msra.mxu0 0.0
    %200 = vmatprep.subr.mxu0 0.0
    %201 = vmatpush1.xpose.msra.mxu0 0.0
    %202 = vmatprep.subr.mxu0 0.0
    %203 = vmatpush1.xpose.msra.mxu0 0.0
    %204 = vmatprep.subr.mxu0 0.0
    %205 = vmatpush1.xpose.msra.mxu0 0.0
    %206 = vmatprep.subr.mxu0 0.0
    %207 = vmatpush1.xpose.msra.mxu0 0.0
    %208 = vmatprep.subr.mxu0 0.0
    %209 = vmatpush1.xpose.msra.mxu0 0.0
    %210 = vmatprep.subr.mxu0 0.0
    %211 = vmatpush1.xpose.msra.mxu0 0.0
    %212 = vmatprep.subr.mxu0 0.0
    %213 = vmatpush1.xpose.msra.mxu0 0.0
    %214 = vmatprep.subr.mxu0 0.0
    %215 = vmatpush1.xpose.msra.mxu0 0.0
    %216 = vmatprep.subr.mxu0 0.0
    %217 = vmatpush1.xpose.msra.mxu0 0.0
    %218 = vmatprep.subr.mxu0 0.0
    %219 = vmatpush1.xpose.msra.mxu0 0.0
    %220 = vmatprep.subr.mxu0 0.0
    %221 = vmatpush1.xpose.msra.mxu0 0.0
    %222 = vmatprep.subr.mxu0 0.0
    %223 = vmatpush1.xpose.msra.mxu0 0.0
    %224 = vmatprep.subr.mxu0 0.0
    %225 = vmatpush1.xpose.msra.mxu0 0.0
    %226 = vmatprep.subr.mxu0 0.0
    %227 = vmatpush1.xpose.msra.mxu0 0.0
    %228 = vmatprep.subr.mxu0 0.0
    %229 = vmatpush1.xpose.msra.mxu0 0.0
    %230 = vmatprep.subr.mxu0 0.0
    %231 = vmatpush1.xpose.msra.mxu0 0.0
    %232 = vmatprep.subr.mxu0 0.0
    %233 = vmatpush1.xpose.msra.mxu0 0.0
    %234 = vmatprep.subr.mxu0 0.0
    %235 = vmatpush1.xpose.msra.mxu0 0.0
    %236 = vmatprep.subr.mxu0 0.0
    %237 = vmatpush1.xpose.msra.mxu0 0.0
    %238 = vmatprep.subr.mxu0 0.0
    %239 = vmatpush1.xpose.msra.mxu0 0.0
    %240 = vmatprep.subr.mxu0 0.0
    %241 = vmatpush1.xpose.msra.mxu0 0.0
    %242 = vmatprep.subr.mxu0 0.0
    %243 = vmatpush1.xpose.msra.mxu0 0.0
    %244 = vmatprep.subr.mxu0 0.0
    %245 = vmatpush1.xpose.msra.mxu0 0.0
    %246 = vmatprep.subr.mxu0 0.0
    %247 = vmatpush1.xpose.msra.mxu0 0.0
    %248 = vmatprep.mubr.f32.mxu0 0.0
    %249 = vmatmul.mubr.f32.gmra.mrb[0].mxu0 %v176
    %v250 = vpop.f32.mrb[0].mxu0
    %v251 = vadd.f32 %v167, %v250
    %v252 = vpop.f32.mrb[0].mxu0
    %253 = vmatprep.mubr.f32.mxu0 0.0
    %254 = vmatmul.mubr.f32.gmra.mrb[0].mxu0 %v178
    %v255 = vpop.f32.mrb[0].mxu0
    %v256 = vadd.f32 %v168, %v255
    %v257 = vpop.f32.mrb[0].mxu0
    %258 = vdwg.mxu0
    %vm259 = vcmask 130048
    %v260 = vsel %vm259, %v251, -inf
    %261 = vmax.xlane.f32.xlu0 %v260
    %v262 = vpop.xlane.xlu0 %261
    %v263 = vsel %vm259, %v256, -inf
    %264 = vmax.xlane.f32.xlu0 %v263
    %v265 = vpop.xlane.xlu0 %264
    %v266 = vsub.f32 %v251, %v262
    %v267 = vsub.f32 %v256, %v265
    %v268 = vmul.f32 %v266, 1.442695
    %v269 = vpow.pop %v268
    %v270 = vmul.f32 %v267, 1.442695
    %v271 = vpow.pop %v270
    %v272 = vsel %vm259, %v269, 0.0
    %273 = vadd.xlane.f32.xlu0 %v272
    %v274 = vpop.xlane.xlu0 %273
    %v275 = vsel %vm259, %v271, 0.0
    %276 = vadd.xlane.f32.xlu0 %v275
    %v277 = vpop.xlane.xlu0 %276
    %v278 = vrcp.pop %v274
    %v279 = vrcp.pop %v277
    %v280 = vmul.f32 %v269, %v278
    %v281 = vmul.f32 %v271, %v279
    %282 = vrot.lane.b32.xlu0 %v161, 64
    %v283 = vpop.permute.xlu0 %282
    %284 = vrot.lane.b32.xlu0 %v164, 64
    %v285 = vpop.permute.xlu0 %284
    %v289 = vsel %vm259, %v280, 0
    %v292 = vsel %vm259, %v281, 0
    %294 = vmatprep.subr.mxu0 0.0
    %295 = vmatpush1.msra.mxu0 %v283
    %296 = vmatprep.subr.mxu0 0.0
    %297 = vmatpush1.msra.mxu0 %v285
    %298 = vmatprep.subr.mxu0 0.0
    %299 = vmatpush1.msra.mxu0 0.0
    %300 = vmatprep.subr.mxu0 0.0
    %301 = vmatpush1.msra.mxu0 0.0
    %302 = vmatprep.subr.mxu0 0.0
    %303 = vmatpush1.msra.mxu0 0.0
    %304 = vmatprep.subr.mxu0 0.0
    %305 = vmatpush1.msra.mxu0 0.0
    %306 = vmatprep.subr.mxu0 0.0
    %307 = vmatpush1.msra.mxu0 0.0
    %308 = vmatprep.subr.mxu0 0.0
    %309 = vmatpush1.msra.mxu0 0.0
    %310 = vmatprep.subr.mxu0 0.0
    %311 = vmatpush1.msra.mxu0 0.0
    %312 = vmatprep.subr.mxu0 0.0
    %313 = vmatpush1.msra.mxu0 0.0
    %314 = vmatprep.subr.mxu0 0.0
    %315 = vmatpush1.msra.mxu0 0.0
    %316 = vmatprep.subr.mxu0 0.0
    %317 = vmatpush1.msra.mxu0 0.0
    %318 = vmatprep.subr.mxu0 0.0
    %319 = vmatpush1.msra.mxu0 0.0
    %320 = vmatprep.subr.mxu0 0.0
    %321 = vmatpush1.msra.mxu0 0.0
    %322 = vmatprep.subr.mxu0 0.0
    %323 = vmatpush1.msra.mxu0 0.0
    %324 = vmatprep.subr.mxu0 0.0
    %325 = vmatpush1.msra.mxu0 0.0
    %326 = vmatprep.subr.mxu0 0.0
    %327 = vmatpush1.msra.mxu0 0.0
    %328 = vmatprep.subr.mxu0 0.0
    %329 = vmatpush1.msra.mxu0 0.0
    %330 = vmatprep.subr.mxu0 0.0
    %331 = vmatpush1.msra.mxu0 0.0
    %332 = vmatprep.subr.mxu0 0.0
    %333 = vmatpush1.msra.mxu0 0.0
    %334 = vmatprep.subr.mxu0 0.0
    %335 = vmatpush1.msra.mxu0 0.0
    %336 = vmatprep.subr.mxu0 0.0
    %337 = vmatpush1.msra.mxu0 0.0
    %338 = vmatprep.subr.mxu0 0.0
    %339 = vmatpush1.msra.mxu0 0.0
    %340 = vmatprep.subr.mxu0 0.0
    %341 = vmatpush1.msra.mxu0 0.0
    %342 = vmatprep.subr.mxu0 0.0
    %343 = vmatpush1.msra.mxu0 0.0
    %344 = vmatprep.subr.mxu0 0.0
    %345 = vmatpush1.msra.mxu0 0.0
    %346 = vmatprep.subr.mxu0 0.0
    %347 = vmatpush1.msra.mxu0 0.0
    %348 = vmatprep.subr.mxu0 0.0
    %349 = vmatpush1.msra.mxu0 0.0
    %350 = vmatprep.subr.mxu0 0.0
    %351 = vmatpush1.msra.mxu0 0.0
    %352 = vmatprep.subr.mxu0 0.0
    %353 = vmatpush1.msra.mxu0 0.0
    %354 = vmatprep.subr.mxu0 0.0
    %355 = vmatpush1.msra.mxu0 0.0
    %356 = vmatprep.subr.mxu0 0.0
    %357 = vmatpush1.msra.mxu0 0.0
    %358 = vmatprep.mubr.f32.mxu0 0.0
    %359 = vmatmul.mubr.f32.gmra.mrb[0].mxu0 %v289
    %v360 = vpop.f32.mrb[0].mxu0
    %v361 = vadd.f32 0.0, %v360
    %v362 = vpop.f32.mrb[0].mxu0
    %363 = vmatprep.mubr.f32.mxu0 0.0
    %364 = vmatmul.mubr.f32.gmra.mrb[0].mxu0 %v292
    %v365 = vpop.f32.mrb[0].mxu0
    %v366 = vadd.f32 0.0, %v365
    %v367 = vpop.f32.mrb[0].mxu0
    %368 = vdwg.mxu0
    %v369 = vpack.c.bf16 %v366, %v361
    %v370 = vld [vmem:[%s6] sm:$0xf]
    %371 = vrot.lane.b32.xlu0 %v161, 120
    %v372 = vpop.permute.xlu0 %371
    %373 = vrot.lane.b32.xlu0 %v164, 120
    %v374 = vpop.permute.xlu0 %373
    %375 = vrot.lane.b32.xlu0 %v161, 88
    %v376 = vpop.permute.xlu0 %375
    %377 = vrot.lane.b32.xlu0 %v164, 88
    %v378 = vpop.permute.xlu0 %377
    %v379 = vsel %vm175, %v372, 0
    %v381 = vsel %vm175, %v374, 0
    %v383 = vsel %vm175, %v376, 0
    %v385 = vsel %vm175, %v378, 0
    %387 = vmatprep.subr.mxu0 0.0
    %388 = vmatpush1.xpose.msra.mxu0 %v383
    %389 = vmatprep.subr.mxu0 0.0
    %390 = vmatpush1.xpose.msra.mxu0 %v385
    %391 = vmatprep.subr.mxu0 0.0
    %392 = vmatpush1.xpose.msra.mxu0 0.0
    %393 = vmatprep.subr.mxu0 0.0
    %394 = vmatpush1.xpose.msra.mxu0 0.0
    %395 = vmatprep.subr.mxu0 0.0
    %396 = vmatpush1.xpose.msra.mxu0 0.0
    %397 = vmatprep.subr.mxu0 0.0
    %398 = vmatpush1.xpose.msra.mxu0 0.0
    %399 = vmatprep.subr.mxu0 0.0
    %400 = vmatpush1.xpose.msra.mxu0 0.0
    %401 = vmatprep.subr.mxu0 0.0
    %402 = vmatpush1.xpose.msra.mxu0 0.0
    %403 = vmatprep.subr.mxu0 0.0
    %404 = vmatpush1.xpose.msra.mxu0 0.0
    %405 = vmatprep.subr.mxu0 0.0
    %406 = vmatpush1.xpose.msra.mxu0 0.0
    %407 = vmatprep.subr.mxu0 0.0
    %408 = vmatpush1.xpose.msra.mxu0 0.0
    %409 = vmatprep.subr.mxu0 0.0
    %410 = vmatpush1.xpose.msra.mxu0 0.0
    %411 = vmatprep.subr.mxu0 0.0
    %412 = vmatpush1.xpose.msra.mxu0 0.0
    %413 = vmatprep.subr.mxu0 0.0
    %414 = vmatpush1.xpose.msra.mxu0 0.0
    %415 = vmatprep.subr.mxu0 0.0
    %416 = vmatpush1.xpose.msra.mxu0 0.0
    %417 = vmatprep.subr.mxu0 0.0
    %418 = vmatpush1.xpose.msra.mxu0 0.0
    %419 = vmatprep.subr.mxu0 0.0
    %420 = vmatpush1.xpose.msra.mxu0 0.0
    %421 = vmatprep.subr.mxu0 0.0
    %422 = vmatpush1.xpose.msra.mxu0 0.0
    %423 = vmatprep.subr.mxu0 0.0
    %424 = vmatpush1.xpose.msra.mxu0 0.0
    %425 = vmatprep.subr.mxu0 0.0
    %426 = vmatpush1.xpose.msra.mxu0 0.0
    %427 = vmatprep.subr.mxu0 0.0
    %428 = vmatpush1.xpose.msra.mxu0 0.0
    %429 = vmatprep.subr.mxu0 0.0
    %430 = vmatpush1.xpose.msra.mxu0 0.0
    %431 = vmatprep.subr.mxu0 0.0
    %432 = vmatpush1.xpose.msra.mxu0 0.0
    %433 = vmatprep.subr.mxu0 0.0
    %434 = vmatpush1.xpose.msra.mxu0 0.0
    %435 = vmatprep.subr.mxu0 0.0
    %436 = vmatpush1.xpose.msra.mxu0 0.0
    %437 = vmatprep.subr.mxu0 0.0
    %438 = vmatpush1.xpose.msra.mxu0 0.0
    %439 = vmatprep.subr.mxu0 0.0
    %440 = vmatpush1.xpose.msra.mxu0 0.0
    %441 = vmatprep.subr.mxu0 0.0
    %442 = vmatpush1.xpose.msra.mxu0 0.0
    %443 = vmatprep.subr.mxu0 0.0
    %444 = vmatpush1.xpose.msra.mxu0 0.0
    %445 = vmatprep.subr.mxu0 0.0
    %446 = vmatpush1.xpose.msra.mxu0 0.0
    %447 = vmatprep.subr.mxu0 0.0
    %448 = vmatpush1.xpose.msra.mxu0 0.0
    %449 = vmatprep.subr.mxu0 0.0
    %450 = vmatpush1.xpose.msra.mxu0 0.0
    %451 = vmatprep.mubr.f32.mxu0 0.0
    %452 = vmatmul.mubr.f32.gmra.mrb[0].mxu0 %v379
    %v453 = vpop.f32.mrb[0].mxu0
    %v454 = vadd.f32 %v167, %v453
    %v455 = vpop.f32.mrb[0].mxu0
    %456 = vmatprep.mubr.f32.mxu0 0.0
    %457 = vmatmul.mubr.f32.gmra.mrb[0].mxu0 %v381
    %v458 = vpop.f32.mrb[0].mxu0
    %v459 = vadd.f32 %v168, %v458
    %v460 = vpop.f32.mrb[0].mxu0
    %461 = vdwg.mxu0
    %v462 = vsel %vm259, %v454, -inf
    %463 = vmax.xlane.f32.xlu0 %v462
    %v464 = vpop.xlane.xlu0 %463
    %v465 = vsel %vm259, %v459, -inf
    %466 = vmax.xlane.f32.xlu0 %v465
    %v467 = vpop.xlane.xlu0 %466
    %v468 = vsub.f32 %v454, %v464
    %v469 = vsub.f32 %v459, %v467
    %v470 = vmul.f32 %v468, 1.442695
    %v471 = vpow.pop %v470
    %v472 = vmul.f32 %v469, 1.442695
    %v473 = vpow.pop %v472
    %v474 = vsel %vm259, %v471, 0.0
    %475 = vadd.xlane.f32.xlu0 %v474
    %v476 = vpop.xlane.xlu0 %475
    %v477 = vsel %vm259, %v473, 0.0
    %478 = vadd.xlane.f32.xlu0 %v477
    %v479 = vpop.xlane.xlu0 %478
    %v480 = vrcp.pop %v476
    %v481 = vrcp.pop %v479
    %v482 = vmul.f32 %v471, %v480
    %v483 = vmul.f32 %v473, %v481
    %484 = vrot.lane.b32.xlu0 %v161, 56
    %v485 = vpop.permute.xlu0 %484
    %486 = vrot.lane.b32.xlu0 %v164, 56
    %v487 = vpop.permute.xlu0 %486
    %v491 = vsel %vm259, %v482, 0
    %v494 = vsel %vm259, %v483, 0
    %496 = vmatprep.subr.mxu0 0.0
    %497 = vmatpush1.msra.mxu0 %v485
    %498 = vmatprep.subr.mxu0 0.0
    %499 = vmatpush1.msra.mxu0 %v487
    %500 = vmatprep.subr.mxu0 0.0
    %501 = vmatpush1.msra.mxu0 0.0
    %502 = vmatprep.subr.mxu0 0.0
    %503 = vmatpush1.msra.mxu0 0.0
    %504 = vmatprep.subr.mxu0 0.0
    %505 = vmatpush1.msra.mxu0 0.0
    %506 = vmatprep.subr.mxu0 0.0
    %507 = vmatpush1.msra.mxu0 0.0
    %508 = vmatprep.subr.mxu0 0.0
    %509 = vmatpush1.msra.mxu0 0.0
    %510 = vmatprep.subr.mxu0 0.0
    %511 = vmatpush1.msra.mxu0 0.0
    %512 = vmatprep.subr.mxu0 0.0
    %513 = vmatpush1.msra.mxu0 0.0
    %514 = vmatprep.subr.mxu0 0.0
    %515 = vmatpush1.msra.mxu0 0.0
    %516 = vmatprep.subr.mxu0 0.0
    %517 = vmatpush1.msra.mxu0 0.0
    %518 = vmatprep.subr.mxu0 0.0
    %519 = vmatpush1.msra.mxu0 0.0
    %520 = vmatprep.subr.mxu0 0.0
    %521 = vmatpush1.msra.mxu0 0.0
    %522 = vmatprep.subr.mxu0 0.0
    %523 = vmatpush1.msra.mxu0 0.0
    %524 = vmatprep.subr.mxu0 0.0
    %525 = vmatpush1.msra.mxu0 0.0
    %526 = vmatprep.subr.mxu0 0.0
    %527 = vmatpush1.msra.mxu0 0.0
    %528 = vmatprep.subr.mxu0 0.0
    %529 = vmatpush1.msra.mxu0 0.0
    %530 = vmatprep.subr.mxu0 0.0
    %531 = vmatpush1.msra.mxu0 0.0
    %532 = vmatprep.subr.mxu0 0.0
    %533 = vmatpush1.msra.mxu0 0.0
    %534 = vmatprep.subr.mxu0 0.0
    %535 = vmatpush1.msra.mxu0 0.0
    %536 = vmatprep.subr.mxu0 0.0
    %537 = vmatpush1.msra.mxu0 0.0
    %538 = vmatprep.subr.mxu0 0.0
    %539 = vmatpush1.msra.mxu0 0.0
    %540 = vmatprep.subr.mxu0 0.0
    %541 = vmatpush1.msra.mxu0 0.0
    %542 = vmatprep.subr.mxu0 0.0
    %543 = vmatpush1.msra.mxu0 0.0
    %544 = vmatprep.subr.mxu0 0.0
    %545 = vmatpush1.msra.mxu0 0.0
    %546 = vmatprep.subr.mxu0 0.0
    %547 = vmatpush1.msra.mxu0 0.0
    %548 = vmatprep.subr.mxu0 0.0
    %549 = vmatpush1.msra.mxu0 0.0
    %550 = vmatprep.subr.mxu0 0.0
    %551 = vmatpush1.msra.mxu0 0.0
    %552 = vmatprep.subr.mxu0 0.0
    %553 = vmatpush1.msra.mxu0 0.0
    %554 = vmatprep.subr.mxu0 0.0
    %555 = vmatpush1.msra.mxu0 0.0
    %556 = vmatprep.subr.mxu0 0.0
    %557 = vmatpush1.msra.mxu0 0.0
    %558 = vmatprep.subr.mxu0 0.0
    %559 = vmatpush1.msra.mxu0 0.0
    %560 = vmatprep.mubr.f32.mxu0 0.0
    %561 = vmatmul.mubr.f32.gmra.mrb[0].mxu0 %v491
    %v562 = vpop.f32.mrb[0].mxu0
    %v563 = vadd.f32 0.0, %v562
    %v564 = vpop.f32.mrb[0].mxu0
    %565 = vmatprep.mubr.f32.mxu0 0.0
    %566 = vmatmul.mubr.f32.gmra.mrb[0].mxu0 %v494
    %v567 = vpop.f32.mrb[0].mxu0
    %v568 = vadd.f32 0.0, %v567
    %v569 = vpop.f32.mrb[0].mxu0
    %570 = vdwg.mxu0
    %v571 = vpack.c.bf16 %v568, %v563
    %s572 = scalar_lea.vmem %s6, 4
    %v573 = vld [vmem:[%s572] sm:$0xf]
    %v575 = vsel %vm175, %v571, 0
    %vm577 = vcmask 1043456
    %v579 = vsel %vm577, %v573, 0
    %581 = vmatprep.subr.bf16.mxu0 0
    %582 = vmatpush1.bf16.msra.mxu0 %v579
    %583 = vmatprep.subr.bf16.mxu0 0
    %584 = vmatpush1.bf16.msra.mxu0 0
    %585 = vmatprep.subr.bf16.mxu0 0
    %586 = vmatpush1.bf16.msra.mxu0 0
    %587 = vmatprep.subr.bf16.mxu0 0
    %588 = vmatpush1.bf16.msra.mxu0 0
    %589 = vmatprep.subr.bf16.mxu0 0
    %590 = vmatpush1.bf16.msra.mxu0 0
    %591 = vmatprep.subr.bf16.mxu0 0
    %592 = vmatpush1.bf16.msra.mxu0 0
    %593 = vmatprep.subr.bf16.mxu0 0
    %594 = vmatpush1.bf16.msra.mxu0 0
    %595 = vmatprep.subr.bf16.mxu0 0
    %596 = vmatpush1.bf16.msra.mxu0 0
    %597 = vmatprep.subr.bf16.mxu0 0
    %598 = vmatpush1.bf16.msra.mxu0 0
    %599 = vmatprep.subr.bf16.mxu0 0
    %600 = vmatpush1.bf16.msra.mxu0 0
    %601 = vmatprep.subr.bf16.mxu0 0
    %602 = vmatpush1.bf16.msra.mxu0 0
    %603 = vmatprep.subr.bf16.mxu0 0
    %604 = vmatpush1.bf16.msra.mxu0 0
    %605 = vmatprep.subr.bf16.mxu0 0
    %606 = vmatpush1.bf16.msra.mxu0 0
    %607 = vmatprep.subr.bf16.mxu0 0
    %608 = vmatpush1.bf16.msra.mxu0 0
    %609 = vmatprep.subr.bf16.mxu0 0
    %610 = vmatpush1.bf16.msra.mxu0 0
    %611 = vmatprep.subr.bf16.mxu0 0
    %612 = vmatpush1.bf16.msra.mxu0 0
    %613 = vmatprep.mubr.bf16.mxu0 0
    %614 = vmatmul.mubr.bf16.gmra.mrb[0].mxu0 %v575
    %v615 = vpop.f32.mrb[0].mxu0
    %v616 = vadd.f32 0.0, %v615
    %v617 = vpop.f32.mrb[0].mxu0
    %v618 = vpop.f32.mrb[0].mxu0
    %v619 = vadd.f32 0.0, %v618
    %v620 = vpop.f32.mrb[0].mxu0
    %621 = vdwg.mxu0
    %v623 = vsel %vm175, %v369, 0
    %v626 = vsel %vm577, %v370, 0
    %628 = vmatprep.subr.bf16.mxu0 0
    %629 = vmatpush1.bf16.msra.mxu0 %v626
    %630 = vmatprep.subr.bf16.mxu0 0
    %631 = vmatpush1.bf16.msra.mxu0 0
    %632 = vmatprep.subr.bf16.mxu0 0
    %633 = vmatpush1.bf16.msra.mxu0 0
    %634 = vmatprep.subr.bf16.mxu0 0
    %635 = vmatpush1.bf16.msra.mxu0 0
    %636 = vmatprep.subr.bf16.mxu0 0
    %637 = vmatpush1.bf16.msra.mxu0 0
    %638 = vmatprep.subr.bf16.mxu0 0
    %639 = vmatpush1.bf16.msra.mxu0 0
    %640 = vmatprep.subr.bf16.mxu0 0
    %641 = vmatpush1.bf16.msra.mxu0 0
    %642 = vmatprep.subr.bf16.mxu0 0
    %643 = vmatpush1.bf16.msra.mxu0 0
    %644 = vmatprep.subr.bf16.mxu0 0
    %645 = vmatpush1.bf16.msra.mxu0 0
    %646 = vmatprep.subr.bf16.mxu0 0
    %647 = vmatpush1.bf16.msra.mxu0 0
    %648 = vmatprep.subr.bf16.mxu0 0
    %649 = vmatpush1.bf16.msra.mxu0 0
    %650 = vmatprep.subr.bf16.mxu0 0
    %651 = vmatpush1.bf16.msra.mxu0 0
    %652 = vmatprep.subr.bf16.mxu0 0
    %653 = vmatpush1.bf16.msra.mxu0 0
    %654 = vmatprep.subr.bf16.mxu0 0
    %655 = vmatpush1.bf16.msra.mxu0 0
    %656 = vmatprep.subr.bf16.mxu0 0
    %657 = vmatpush1.bf16.msra.mxu0 0
    %658 = vmatprep.subr.bf16.mxu0 0
    %659 = vmatpush1.bf16.msra.mxu0 0
    %660 = vmatprep.mubr.bf16.mxu0 0
    %661 = vmatmul.mubr.bf16.gmra.mrb[0].mxu0 %v623
    %v662 = vpop.f32.mrb[0].mxu0
    %v663 = vadd.f32 %v616, %v662
    %v664 = vpop.f32.mrb[0].mxu0
    %v665 = vpop.f32.mrb[0].mxu0
    %v666 = vadd.f32 %v619, %v665
    %v667 = vpop.f32.mrb[0].mxu0
    %668 = vdwg.mxu0
    %669 = vrot.lane.b32.xlu0 %v161, 112
    %v670 = vpop.permute.xlu0 %669
    %671 = vrot.lane.b32.xlu0 %v164, 112
    %v672 = vpop.permute.xlu0 %671
    %673 = vrot.lane.b32.xlu0 %v161, 80
    %v674 = vpop.permute.xlu0 %673
    %675 = vrot.lane.b32.xlu0 %v164, 80
    %v676 = vpop.permute.xlu0 %675
    %v677 = vsel %vm175, %v670, 0
    %v679 = vsel %vm175, %v672, 0
    %v681 = vsel %vm175, %v674, 0
    %v683 = vsel %vm175, %v676, 0
    %685 = vmatprep.subr.mxu0 0.0
    %686 = vmatpush1.xpose.msra.mxu0 %v681
    %687 = vmatprep.subr.mxu0 0.0
    %688 = vmatpush1.xpose.msra.mxu0 %v683
    %689 = vmatprep.subr.mxu0 0.0
    %690 = vmatpush1.xpose.msra.mxu0 0.0
    %691 = vmatprep.subr.mxu0 0.0
    %692 = vmatpush1.xpose.msra.mxu0 0.0
    %693 = vmatprep.subr.mxu0 0.0
    %694 = vmatpush1.xpose.msra.mxu0 0.0
    %695 = vmatprep.subr.mxu0 0.0
    %696 = vmatpush1.xpose.msra.mxu0 0.0
    %697 = vmatprep.subr.mxu0 0.0
    %698 = vmatpush1.xpose.msra.mxu0 0.0
    %699 = vmatprep.subr.mxu0 0.0
    %700 = vmatpush1.xpose.msra.mxu0 0.0
    %701 = vmatprep.subr.mxu0 0.0
    %702 = vmatpush1.xpose.msra.mxu0 0.0
    %703 = vmatprep.subr.mxu0 0.0
    %704 = vmatpush1.xpose.msra.mxu0 0.0
    %705 = vmatprep.subr.mxu0 0.0
    %706 = vmatpush1.xpose.msra.mxu0 0.0
    %707 = vmatprep.subr.mxu0 0.0
    %708 = vmatpush1.xpose.msra.mxu0 0.0
    %709 = vmatprep.subr.mxu0 0.0
    %710 = vmatpush1.xpose.msra.mxu0 0.0
    %711 = vmatprep.subr.mxu0 0.0
    %712 = vmatpush1.xpose.msra.mxu0 0.0
    %713 = vmatprep.subr.mxu0 0.0
    %714 = vmatpush1.xpose.msra.mxu0 0.0
    %715 = vmatprep.subr.mxu0 0.0
    %716 = vmatpush1.xpose.msra.mxu0 0.0
    %717 = vmatprep.subr.mxu0 0.0
    %718 = vmatpush1.xpose.msra.mxu0 0.0
    %719 = vmatprep.subr.mxu0 0.0
    %720 = vmatpush1.xpose.msra.mxu0 0.0
    %721 = vmatprep.subr.mxu0 0.0
    %722 = vmatpush1.xpose.msra.mxu0 0.0
    %723 = vmatprep.subr.mxu0 0.0
    %724 = vmatpush1.xpose.msra.mxu0 0.0
    %725 = vmatprep.subr.mxu0 0.0
    %726 = vmatpush1.xpose.msra.mxu0 0.0
    %727 = vmatprep.subr.mxu0 0.0
    %728 = vmatpush1.xpose.msra.mxu0 0.0
    %729 = vmatprep.subr.mxu0 0.0
    %730 = vmatpush1.xpose.msra.mxu0 0.0
    %731 = vmatprep.subr.mxu0 0.0
    %732 = vmatpush1.xpose.msra.mxu0 0.0
    %733 = vmatprep.subr.mxu0 0.0
    %734 = vmatpush1.xpose.msra.mxu0 0.0
    %735 = vmatprep.subr.mxu0 0.0
    %736 = vmatpush1.xpose.msra.mxu0 0.0
    %737 = vmatprep.subr.mxu0 0.0
    %738 = vmatpush1.xpose.msra.mxu0 0.0
    %739 = vmatprep.subr.mxu0 0.0
    %740 = vmatpush1.xpose.msra.mxu0 0.0
    %741 = vmatprep.subr.mxu0 0.0
    %742 = vmatpush1.xpose.msra.mxu0 0.0
    %743 = vmatprep.subr.mxu0 0.0
    %744 = vmatpush1.xpose.msra.mxu0 0.0
    %745 = vmatprep.subr.mxu0 0.0
    %746 = vmatpush1.xpose.msra.mxu0 0.0
    %747 = vmatprep.subr.mxu0 0.0
    %748 = vmatpush1.xpose.msra.mxu0 0.0
    %749 = vmatprep.mubr.f32.mxu0 0.0
    %750 = vmatmul.mubr.f32.gmra.mrb[0].mxu0 %v677
    %v751 = vpop.f32.mrb[0].mxu0
    %v752 = vadd.f32 %v167, %v751
    %v753 = vpop.f32.mrb[0].mxu0
    %754 = vmatprep.mubr.f32.mxu0 0.0
    %755 = vmatmul.mubr.f32.gmra.mrb[0].mxu0 %v679
    %v756 = vpop.f32.mrb[0].mxu0
    %v757 = vadd.f32 %v168, %v756
    %v758 = vpop.f32.mrb[0].mxu0
    %759 = vdwg.mxu0
    %v760 = vsel %vm259, %v752, -inf
    %761 = vmax.xlane.f32.xlu0 %v760
    %v762 = vpop.xlane.xlu0 %761
    %v763 = vsel %vm259, %v757, -inf
    %764 = vmax.xlane.f32.xlu0 %v763
    %v765 = vpop.xlane.xlu0 %764
    %v766 = vsub.f32 %v752, %v762
    %v767 = vsub.f32 %v757, %v765
    %v768 = vmul.f32 %v766, 1.442695
    %v769 = vpow.pop %v768
    %v770 = vmul.f32 %v767, 1.442695
    %v771 = vpow.pop %v770
    %v772 = vsel %vm259, %v769, 0.0
    %773 = vadd.xlane.f32.xlu0 %v772
    %v774 = vpop.xlane.xlu0 %773
    %v775 = vsel %vm259, %v771, 0.0
    %776 = vadd.xlane.f32.xlu0 %v775
    %v777 = vpop.xlane.xlu0 %776
    %v778 = vrcp.pop %v774
    %v779 = vrcp.pop %v777
    %v780 = vmul.f32 %v769, %v778
    %v781 = vmul.f32 %v771, %v779
    %782 = vrot.lane.b32.xlu0 %v161, 48
    %v783 = vpop.permute.xlu0 %782
    %784 = vrot.lane.b32.xlu0 %v164, 48
    %v785 = vpop.permute.xlu0 %784
    %v789 = vsel %vm259, %v780, 0
    %v792 = vsel %vm259, %v781, 0
    %794 = vmatprep.subr.mxu0 0.0
    %795 = vmatpush1.msra.mxu0 %v783
    %796 = vmatprep.subr.mxu0 0.0
    %797 = vmatpush1.msra.mxu0 %v785
    %798 = vmatprep.subr.mxu0 0.0
    %799 = vmatpush1.msra.mxu0 0.0
    %800 = vmatprep.subr.mxu0 0.0
    %801 = vmatpush1.msra.mxu0 0.0
    %802 = vmatprep.subr.mxu0 0.0
    %803 = vmatpush1.msra.mxu0 0.0
    %804 = vmatprep.subr.mxu0 0.0
    %805 = vmatpush1.msra.mxu0 0.0
    %806 = vmatprep.subr.mxu0 0.0
    %807 = vmatpush1.msra.mxu0 0.0
    %808 = vmatprep.subr.mxu0 0.0
    %809 = vmatpush1.msra.mxu0 0.0
    %810 = vmatprep.subr.mxu0 0.0
    %811 = vmatpush1.msra.mxu0 0.0
    %812 = vmatprep.subr.mxu0 0.0
    %813 = vmatpush1.msra.mxu0 0.0
    %814 = vmatprep.subr.mxu0 0.0
    %815 = vmatpush1.msra.mxu0 0.0
    %816 = vmatprep.subr.mxu0 0.0
    %817 = vmatpush1.msra.mxu0 0.0
    %818 = vmatprep.subr.mxu0 0.0
    %819 = vmatpush1.msra.mxu0 0.0
    %820 = vmatprep.subr.mxu0 0.0
    %821 = vmatpush1.msra.mxu0 0.0
    %822 = vmatprep.subr.mxu0 0.0
    %823 = vmatpush1.msra.mxu0 0.0
    %824 = vmatprep.subr.mxu0 0.0
    %825 = vmatpush1.msra.mxu0 0.0
    %826 = vmatprep.subr.mxu0 0.0
    %827 = vmatpush1.msra.mxu0 0.0
    %828 = vmatprep.subr.mxu0 0.0
    %829 = vmatpush1.msra.mxu0 0.0
    %830 = vmatprep.subr.mxu0 0.0
    %831 = vmatpush1.msra.mxu0 0.0
    %832 = vmatprep.subr.mxu0 0.0
    %833 = vmatpush1.msra.mxu0 0.0
    %834 = vmatprep.subr.mxu0 0.0
    %835 = vmatpush1.msra.mxu0 0.0
    %836 = vmatprep.subr.mxu0 0.0
    %837 = vmatpush1.msra.mxu0 0.0
    %838 = vmatprep.subr.mxu0 0.0
    %839 = vmatpush1.msra.mxu0 0.0
    %840 = vmatprep.subr.mxu0 0.0
    %841 = vmatpush1.msra.mxu0 0.0
    %842 = vmatprep.subr.mxu0 0.0
    %843 = vmatpush1.msra.mxu0 0.0
    %844 = vmatprep.subr.mxu0 0.0
    %845 = vmatpush1.msra.mxu0 0.0
    %846 = vmatprep.subr.mxu0 0.0
    %847 = vmatpush1.msra.mxu0 0.0
    %848 = vmatprep.subr.mxu0 0.0
    %849 = vmatpush1.msra.mxu0 0.0
    %850 = vmatprep.subr.mxu0 0.0
    %851 = vmatpush1.msra.mxu0 0.0
    %852 = vmatprep.subr.mxu0 0.0
    %853 = vmatpush1.msra.mxu0 0.0
    %854 = vmatprep.subr.mxu0 0.0
    %855 = vmatpush1.msra.mxu0 0.0
    %856 = vmatprep.subr.mxu0 0.0
    %857 = vmatpush1.msra.mxu0 0.0
    %858 = vmatprep.mubr.f32.mxu0 0.0
    %859 = vmatmul.mubr.f32.gmra.mrb[0].mxu0 %v789
    %v860 = vpop.f32.mrb[0].mxu0
    %v861 = vadd.f32 0.0, %v860
    %v862 = vpop.f32.mrb[0].mxu0
    %863 = vmatprep.mubr.f32.mxu0 0.0
    %864 = vmatmul.mubr.f32.gmra.mrb[0].mxu0 %v792
    %v865 = vpop.f32.mrb[0].mxu0
    %v866 = vadd.f32 0.0, %v865
    %v867 = vpop.f32.mrb[0].mxu0
    %868 = vdwg.mxu0
    %v869 = vpack.c.bf16 %v866, %v861
    %s870 = scalar_lea.vmem %s6, 8
    %v871 = vld [vmem:[%s870] sm:$0xf]
    %v873 = vsel %vm175, %v869, 0
    %v876 = vsel %vm577, %v871, 0
    %878 = vmatprep.subr.bf16.mxu0 0
    %879 = vmatpush1.bf16.msra.mxu0 %v876
    %880 = vmatprep.subr.bf16.mxu0 0
    %881 = vmatpush1.bf16.msra.mxu0 0
    %882 = vmatprep.subr.bf16.mxu0 0
    %883 = vmatpush1.bf16.msra.mxu0 0
    %884 = vmatprep.subr.bf16.mxu0 0
    %885 = vmatpush1.bf16.msra.mxu0 0
    %886 = vmatprep.subr.bf16.mxu0 0
    %887 = vmatpush1.bf16.msra.mxu0 0
    %888 = vmatprep.subr.bf16.mxu0 0
    %889 = vmatpush1.bf16.msra.mxu0 0
    %890 = vmatprep.subr.bf16.mxu0 0
    %891 = vmatpush1.bf16.msra.mxu0 0
    %892 = vmatprep.subr.bf16.mxu0 0
    %893 = vmatpush1.bf16.msra.mxu0 0
    %894 = vmatprep.subr.bf16.mxu0 0
    %895 = vmatpush1.bf16.msra.mxu0 0
    %896 = vmatprep.subr.bf16.mxu0 0
    %897 = vmatpush1.bf16.msra.mxu0 0
    %898 = vmatprep.subr.bf16.mxu0 0
    %899 = vmatpush1.bf16.msra.mxu0 0
    %900 = vmatprep.subr.bf16.mxu0 0
    %901 = vmatpush1.bf16.msra.mxu0 0
    %902 = vmatprep.subr.bf16.mxu0 0
    %903 = vmatpush1.bf16.msra.mxu0 0
    %904 = vmatprep.subr.bf16.mxu0 0
    %905 = vmatpush1.bf16.msra.mxu0 0
    %906 = vmatprep.subr.bf16.mxu0 0
    %907 = vmatpush1.bf16.msra.mxu0 0
    %908 = vmatprep.subr.bf16.mxu0 0
    %909 = vmatpush1.bf16.msra.mxu0 0
    %910 = vmatprep.mubr.bf16.mxu0 0
    %911 = vmatmul.mubr.bf16.gmra.mrb[0].mxu0 %v873
    %v912 = vpop.f32.mrb[0].mxu0
    %v913 = vadd.f32 0.0, %v912
    %v914 = vpop.f32.mrb[0].mxu0
    %v915 = vpop.f32.mrb[0].mxu0
    %v916 = vadd.f32 0.0, %v915
    %v917 = vpop.f32.mrb[0].mxu0
    %918 = vdwg.mxu0
    %v919 = vadd.f32 %v663, %v913
    %v920 = vadd.f32 %v666, %v916
    %921 = vrot.lane.b32.xlu0 %v161, 104
    %v922 = vpop.permute.xlu0 %921
    %923 = vrot.lane.b32.xlu0 %v164, 104
    %v924 = vpop.permute.xlu0 %923
    %925 = vrot.lane.b32.xlu0 %v161, 72
    %v926 = vpop.permute.xlu0 %925
    %927 = vrot.lane.b32.xlu0 %v164, 72
    %v928 = vpop.permute.xlu0 %927
    %v929 = vsel %vm175, %v922, 0
    %v931 = vsel %vm175, %v924, 0
    %v933 = vsel %vm175, %v926, 0
    %v935 = vsel %vm175, %v928, 0
    %937 = vmatprep.subr.mxu0 0.0
    %938 = vmatpush1.xpose.msra.mxu0 %v933
    %939 = vmatprep.subr.mxu0 0.0
    %940 = vmatpush1.xpose.msra.mxu0 %v935
    %941 = vmatprep.subr.mxu0 0.0
    %942 = vmatpush1.xpose.msra.mxu0 0.0
    %943 = vmatprep.subr.mxu0 0.0
    %944 = vmatpush1.xpose.msra.mxu0 0.0
    %945 = vmatprep.subr.mxu0 0.0
    %946 = vmatpush1.xpose.msra.mxu0 0.0
    %947 = vmatprep.subr.mxu0 0.0
    %948 = vmatpush1.xpose.msra.mxu0 0.0
    %949 = vmatprep.subr.mxu0 0.0
    %950 = vmatpush1.xpose.msra.mxu0 0.0
    %951 = vmatprep.subr.mxu0 0.0
    %952 = vmatpush1.xpose.msra.mxu0 0.0
    %953 = vmatprep.subr.mxu0 0.0
    %954 = vmatpush1.xpose.msra.mxu0 0.0
    %955 = vmatprep.subr.mxu0 0.0
    %956 = vmatpush1.xpose.msra.mxu0 0.0
    %957 = vmatprep.subr.mxu0 0.0
    %958 = vmatpush1.xpose.msra.mxu0 0.0
    %959 = vmatprep.subr.mxu0 0.0
    %960 = vmatpush1.xpose.msra.mxu0 0.0
    %961 = vmatprep.subr.mxu0 0.0
    %962 = vmatpush1.xpose.msra.mxu0 0.0
    %963 = vmatprep.subr.mxu0 0.0
    %964 = vmatpush1.xpose.msra.mxu0 0.0
    %965 = vmatprep.subr.mxu0 0.0
    %966 = vmatpush1.xpose.msra.mxu0 0.0
    %967 = vmatprep.subr.mxu0 0.0
    %968 = vmatpush1.xpose.msra.mxu0 0.0
    %969 = vmatprep.subr.mxu0 0.0
    %970 = vmatpush1.xpose.msra.mxu0 0.0
    %971 = vmatprep.subr.mxu0 0.0
    %972 = vmatpush1.xpose.msra.mxu0 0.0
    %973 = vmatprep.subr.mxu0 0.0
    %974 = vmatpush1.xpose.msra.mxu0 0.0
    %975 = vmatprep.subr.mxu0 0.0
    %976 = vmatpush1.xpose.msra.mxu0 0.0
    %977 = vmatprep.subr.mxu0 0.0
    %978 = vmatpush1.xpose.msra.mxu0 0.0
    %979 = vmatprep.subr.mxu0 0.0
    %980 = vmatpush1.xpose.msra.mxu0 0.0
    %981 = vmatprep.subr.mxu0 0.0
    %982 = vmatpush1.xpose.msra.mxu0 0.0
    %983 = vmatprep.subr.mxu0 0.0
    %984 = vmatpush1.xpose.msra.mxu0 0.0
    %985 = vmatprep.subr.mxu0 0.0
    %986 = vmatpush1.xpose.msra.mxu0 0.0
    %987 = vmatprep.subr.mxu0 0.0
    %988 = vmatpush1.xpose.msra.mxu0 0.0
    %989 = vmatprep.subr.mxu0 0.0
    %990 = vmatpush1.xpose.msra.mxu0 0.0
    %991 = vmatprep.subr.mxu0 0.0
    %992 = vmatpush1.xpose.msra.mxu0 0.0
    %993 = vmatprep.subr.mxu0 0.0
    %994 = vmatpush1.xpose.msra.mxu0 0.0
    %995 = vmatprep.subr.mxu0 0.0
    %996 = vmatpush1.xpose.msra.mxu0 0.0
    %997 = vmatprep.subr.mxu0 0.0
    %998 = vmatpush1.xpose.msra.mxu0 0.0
    %999 = vmatprep.subr.mxu0 0.0
    %1000 = vmatpush1.xpose.msra.mxu0 0.0
    %1001 = vmatprep.mubr.f32.mxu0 0.0
    %1002 = vmatmul.mubr.f32.gmra.mrb[0].mxu0 %v929
    %v1003 = vpop.f32.mrb[0].mxu0
    %v1004 = vadd.f32 %v167, %v1003
    %v1005 = vpop.f32.mrb[0].mxu0
    %1006 = vmatprep.mubr.f32.mxu0 0.0
    %1007 = vmatmul.mubr.f32.gmra.mrb[0].mxu0 %v931
    %v1008 = vpop.f32.mrb[0].mxu0
    %v1009 = vadd.f32 %v168, %v1008
    %v1010 = vpop.f32.mrb[0].mxu0
    %1011 = vdwg.mxu0
    %v1012 = vsel %vm259, %v1004, -inf
    %1013 = vmax.xlane.f32.xlu0 %v1012
    %v1014 = vpop.xlane.xlu0 %1013
    %v1015 = vsel %vm259, %v1009, -inf
    %1016 = vmax.xlane.f32.xlu0 %v1015
    %v1017 = vpop.xlane.xlu0 %1016
    %v1018 = vsub.f32 %v1004, %v1014
    %v1019 = vsub.f32 %v1009, %v1017
    %v1020 = vmul.f32 %v1018, 1.442695
    %v1021 = vpow.pop %v1020
    %v1022 = vmul.f32 %v1019, 1.442695
    %v1023 = vpow.pop %v1022
    %v1024 = vsel %vm259, %v1021, 0.0
    %1025 = vadd.xlane.f32.xlu0 %v1024
    %v1026 = vpop.xlane.xlu0 %1025
    %v1027 = vsel %vm259, %v1023, 0.0
    %1028 = vadd.xlane.f32.xlu0 %v1027
    %v1029 = vpop.xlane.xlu0 %1028
    %v1030 = vrcp.pop %v1026
    %v1031 = vrcp.pop %v1029
    %v1032 = vmul.f32 %v1021, %v1030
    %v1033 = vmul.f32 %v1023, %v1031
    %1034 = vrot.lane.b32.xlu0 %v161, 40
    %v1035 = vpop.permute.xlu0 %1034
    %1036 = vrot.lane.b32.xlu0 %v164, 40
    %v1037 = vpop.permute.xlu0 %1036
    %v1041 = vsel %vm259, %v1032, 0
    %v1044 = vsel %vm259, %v1033, 0
    %1046 = vmatprep.subr.mxu0 0.0
    %1047 = vmatpush1.msra.mxu0 %v1035
    %1048 = vmatprep.subr.mxu0 0.0
    %1049 = vmatpush1.msra.mxu0 %v1037
    %1050 = vmatprep.subr.mxu0 0.0
    %1051 = vmatpush1.msra.mxu0 0.0
    %1052 = vmatprep.subr.mxu0 0.0
    %1053 = vmatpush1.msra.mxu0 0.0
    %1054 = vmatprep.subr.mxu0 0.0
    %1055 = vmatpush1.msra.mxu0 0.0
    %1056 = vmatprep.subr.mxu0 0.0
    %1057 = vmatpush1.msra.mxu0 0.0
    %1058 = vmatprep.subr.mxu0 0.0
    %1059 = vmatpush1.msra.mxu0 0.0
    %1060 = vmatprep.subr.mxu0 0.0
    %1061 = vmatpush1.msra.mxu0 0.0
    %1062 = vmatprep.subr.mxu0 0.0
    %1063 = vmatpush1.msra.mxu0 0.0
    %1064 = vmatprep.subr.mxu0 0.0
    %1065 = vmatpush1.msra.mxu0 0.0
    %1066 = vmatprep.subr.mxu0 0.0
    %1067 = vmatpush1.msra.mxu0 0.0
    %1068 = vmatprep.subr.mxu0 0.0
    %1069 = vmatpush1.msra.mxu0 0.0
    %1070 = vmatprep.subr.mxu0 0.0
    %1071 = vmatpush1.msra.mxu0 0.0
    %1072 = vmatprep.subr.mxu0 0.0
    %1073 = vmatpush1.msra.mxu0 0.0
    %1074 = vmatprep.subr.mxu0 0.0
    %1075 = vmatpush1.msra.mxu0 0.0
    %1076 = vmatprep.subr.mxu0 0.0
    %1077 = vmatpush1.msra.mxu0 0.0
    %1078 = vmatprep.subr.mxu0 0.0
    %1079 = vmatpush1.msra.mxu0 0.0
    %1080 = vmatprep.subr.mxu0 0.0
    %1081 = vmatpush1.msra.mxu0 0.0
    %1082 = vmatprep.subr.mxu0 0.0
    %1083 = vmatpush1.msra.mxu0 0.0
    %1084 = vmatprep.subr.mxu0 0.0
    %1085 = vmatpush1.msra.mxu0 0.0
    %1086 = vmatprep.subr.mxu0 0.0
    %1087 = vmatpush1.msra.mxu0 0.0
    %1088 = vmatprep.subr.mxu0 0.0
    %1089 = vmatpush1.msra.mxu0 0.0
    %1090 = vmatprep.subr.mxu0 0.0
    %1091 = vmatpush1.msra.mxu0 0.0
    %1092 = vmatprep.subr.mxu0 0.0
    %1093 = vmatpush1.msra.mxu0 0.0
    %1094 = vmatprep.subr.mxu0 0.0
    %1095 = vmatpush1.msra.mxu0 0.0
    %1096 = vmatprep.subr.mxu0 0.0
    %1097 = vmatpush1.msra.mxu0 0.0
    %1098 = vmatprep.subr.mxu0 0.0
    %1099 = vmatpush1.msra.mxu0 0.0
    %1100 = vmatprep.subr.mxu0 0.0
    %1101 = vmatpush1.msra.mxu0 0.0
    %1102 = vmatprep.subr.mxu0 0.0
    %1103 = vmatpush1.msra.mxu0 0.0
    %1104 = vmatprep.subr.mxu0 0.0
    %1105 = vmatpush1.msra.mxu0 0.0
    %1106 = vmatprep.subr.mxu0 0.0
    %1107 = vmatpush1.msra.mxu0 0.0
    %1108 = vmatprep.subr.mxu0 0.0
    %1109 = vmatpush1.msra.mxu0 0.0
    %1110 = vmatprep.mubr.f32.mxu0 0.0
    %1111 = vmatmul.mubr.f32.gmra.mrb[0].mxu0 %v1041
    %v1112 = vpop.f32.mrb[0].mxu0
    %v1113 = vadd.f32 0.0, %v1112
    %v1114 = vpop.f32.mrb[0].mxu0
    %1115 = vmatprep.mubr.f32.mxu0 0.0
    %1116 = vmatmul.mubr.f32.gmra.mrb[0].mxu0 %v1044
    %v1117 = vpop.f32.mrb[0].mxu0
    %v1118 = vadd.f32 0.0, %v1117
    %v1119 = vpop.f32.mrb[0].mxu0
    %1120 = vdwg.mxu0
    %v1121 = vpack.c.bf16 %v1118, %v1113
    %s1122 = scalar_lea.vmem %s6, 12
    %v1123 = vld [vmem:[%s1122] sm:$0xf]
    %v1125 = vsel %vm175, %v1121, 0
    %v1128 = vsel %vm577, %v1123, 0
    %1130 = vmatprep.subr.bf16.mxu0 0
    %1131 = vmatpush1.bf16.msra.mxu0 %v1128
    %1132 = vmatprep.subr.bf16.mxu0 0
    %1133 = vmatpush1.bf16.msra.mxu0 0
    %1134 = vmatprep.subr.bf16.mxu0 0
    %1135 = vmatpush1.bf16.msra.mxu0 0
    %1136 = vmatprep.subr.bf16.mxu0 0
    %1137 = vmatpush1.bf16.msra.mxu0 0
    %1138 = vmatprep.subr.bf16.mxu0 0
    %1139 = vmatpush1.bf16.msra.mxu0 0
    %1140 = vmatprep.subr.bf16.mxu0 0
    %1141 = vmatpush1.bf16.msra.mxu0 0
    %1142 = vmatprep.subr.bf16.mxu0 0
    %1143 = vmatpush1.bf16.msra.mxu0 0
    %1144 = vmatprep.subr.bf16.mxu0 0
    %1145 = vmatpush1.bf16.msra.mxu0 0
    %1146 = vmatprep.subr.bf16.mxu0 0
    %1147 = vmatpush1.bf16.msra.mxu0 0
    %1148 = vmatprep.subr.bf16.mxu0 0
    %1149 = vmatpush1.bf16.msra.mxu0 0
    %1150 = vmatprep.subr.bf16.mxu0 0
    %1151 = vmatpush1.bf16.msra.mxu0 0
    %1152 = vmatprep.subr.bf16.mxu0 0
    %1153 = vmatpush1.bf16.msra.mxu0 0
    %1154 = vmatprep.subr.bf16.mxu0 0
    %1155 = vmatpush1.bf16.msra.mxu0 0
    %1156 = vmatprep.subr.bf16.mxu0 0
    %1157 = vmatpush1.bf16.msra.mxu0 0
    %1158 = vmatprep.subr.bf16.mxu0 0
    %1159 = vmatpush1.bf16.msra.mxu0 0
    %1160 = vmatprep.subr.bf16.mxu0 0
    %1161 = vmatpush1.bf16.msra.mxu0 0
    %1162 = vmatprep.mubr.bf16.mxu0 0
    %1163 = vmatmul.mubr.bf16.gmra.mrb[0].mxu0 %v1125
    %v1164 = vpop.f32.mrb[0].mxu0
    %v1165 = vadd.f32 0.0, %v1164
    %v1166 = vpop.f32.mrb[0].mxu0
    %v1167 = vpop.f32.mrb[0].mxu0
    %v1168 = vadd.f32 0.0, %v1167
    %v1169 = vpop.f32.mrb[0].mxu0
    %1170 = vdwg.mxu0
    %v1171 = vadd.f32 %v919, %v1165
    %v1172 = vadd.f32 %v920, %v1168
    %v1173 = vadd.f32 %v51, %v1171
    %v1174 = vadd.f32 %v52, %v1172
    %v1175 = vld [vmem:[%s7] sm:$0x1]
    %v1177 = vlaneseq
    %v1178 = vshrl.u32 %v1177, 7
    %v1179 = vsub.s32 0, %v1178
    %v1180 = vrot.slane %v1175, %v1179
    %v1182 = vadd.f32 %v1173, %v1180
    %v1183 = vadd.f32 %v1174, %v1180
    %v1184 = vld [vmem:[%s8] sm:$0x1]
    %v1185 = vld [vmem:[%s9] sm:$0x1]
    %v1186 = vsel %vm55, %v1182, 0.0
    %1187 = vadd.xlane.f32.xlu0 %v1186
    %v1188 = vpop.xlane.xlu0 %1187
    %v1189 = vsel %vm55, %v1183, 0.0
    %1190 = vadd.xlane.f32.xlu0 %v1189
    %v1191 = vpop.xlane.xlu0 %1190
    %v1192 = vmul.f32 %v1188, %v62
    %v1193 = vmul.f32 %v1191, %v62
    %v1194 = vsub.f32 %v1182, %v1192
    %v1195 = vsub.f32 %v1183, %v1193
    %v1196 = vmul.f32 %v1194, %v1194
    %v1197 = vmul.f32 %v1195, %v1195
    %v1198 = vsel %vm55, %v1196, 0.0
    %1199 = vadd.xlane.f32.xlu0 %v1198
    %v1200 = vpop.xlane.xlu0 %1199
    %v1201 = vsel %vm55, %v1197, 0.0
    %1202 = vadd.xlane.f32.xlu0 %v1201
    %v1203 = vpop.xlane.xlu0 %1202
    %v1204 = vmul.f32 %v1200, %v62
    %v1205 = vmul.f32 %v1203, %v62
    %v1206 = vadd.f32 %v1204, 1e-05
    %v1207 = vadd.f32 %v1205, 1e-05
    %v1208 = vrsqrt.pop %v1206
    %v1209 = vrsqrt.pop %v1207
    %v1210 = vmul.f32 %v1194, %v1208
    %v1211 = vmul.f32 %v1195, %v1209
    %v1213 = vlaneseq
    %v1214 = vshrl.u32 %v1213, 7
    %v1215 = vsub.s32 0, %v1214
    %v1216 = vrot.slane %v1184, %v1215
    %v1218 = vmul.f32 %v1210, %v1216
    %v1219 = vmul.f32 %v1211, %v1216
    %v1221 = vlaneseq
    %v1222 = vshrl.u32 %v1221, 7
    %v1223 = vsub.s32 0, %v1222
    %v1224 = vrot.slane %v1185, %v1223
    %v1226 = vadd.f32 %v1218, %v1224
    %v1227 = vadd.f32 %v1219, %v1224
    %v1228 = vpack.c.bf16 %v1227, %v1226
    %v1229 = vld [vmem:[%s10] sm:$0xf]
    %v1230 = vld [vmem:[%s10 + $0x4] sm:$0xf]
    %v1231 = vld [vmem:[%s10 + $0x8] sm:$0xf]
    %v1232 = vld [vmem:[%s10 + $0xc] sm:$0xf]
    %v1233 = vld [vmem:[%s11] sm:$0x1]
    %v1235 = vlaneseq
    %v1236 = vshrl.u32 %v1235, 7
    %v1237 = vsub.s32 0, %v1236
    %v1238 = vrot.slane %v1233, %v1237
    %v1244 = vunpack.c.l.b16 %v1229
    %v1245 = vunpack.c.l.b16 %v1230
    %v1246 = vunpack.c.l.b16 %v1231
    %v1247 = vunpack.c.l.b16 %v1232
    %v1248 = vpack.c.b16 %v1245, %v1244
    %v1249 = vpack.c.b16 %v1247, %v1246
    %v1253 = vsel %vm55, %v1228, 0
    %1255 = vmatprep.subr.bf16.mxu0 0
    %1256 = vmatpush1.bf16.msra.mxu0 %v1248
    %1257 = vmatprep.subr.bf16.mxu0 0
    %1258 = vmatpush1.bf16.msra.mxu0 %v1249
    %1259 = vmatprep.subr.bf16.mxu0 0
    %1260 = vmatpush1.bf16.msra.mxu0 0
    %1261 = vmatprep.subr.bf16.mxu0 0
    %1262 = vmatpush1.bf16.msra.mxu0 0
    %1263 = vmatprep.subr.bf16.mxu0 0
    %1264 = vmatpush1.bf16.msra.mxu0 0
    %1265 = vmatprep.subr.bf16.mxu0 0
    %1266 = vmatpush1.bf16.msra.mxu0 0
    %1267 = vmatprep.subr.bf16.mxu0 0
    %1268 = vmatpush1.bf16.msra.mxu0 0
    %1269 = vmatprep.subr.bf16.mxu0 0
    %1270 = vmatpush1.bf16.msra.mxu0 0
    %1271 = vmatprep.subr.bf16.mxu0 0
    %1272 = vmatpush1.bf16.msra.mxu0 0
    %1273 = vmatprep.subr.bf16.mxu0 0
    %1274 = vmatpush1.bf16.msra.mxu0 0
    %1275 = vmatprep.subr.bf16.mxu0 0
    %1276 = vmatpush1.bf16.msra.mxu0 0
    %1277 = vmatprep.subr.bf16.mxu0 0
    %1278 = vmatpush1.bf16.msra.mxu0 0
    %1279 = vmatprep.subr.bf16.mxu0 0
    %1280 = vmatpush1.bf16.msra.mxu0 0
    %1281 = vmatprep.subr.bf16.mxu0 0
    %1282 = vmatpush1.bf16.msra.mxu0 0
    %1283 = vmatprep.subr.bf16.mxu0 0
    %1284 = vmatpush1.bf16.msra.mxu0 0
    %1285 = vmatprep.subr.bf16.mxu0 0
    %1286 = vmatpush1.bf16.msra.mxu0 0
    %1287 = vmatprep.mubr.bf16.mxu0 0
    %1288 = vmatmul.mubr.bf16.gmra.mrb[0].mxu0 %v1253
    %v1289 = vpop.f32.mrb[0].mxu0
    %v1290 = vadd.f32 %v1238, %v1289
    %v1291 = vpop.f32.mrb[0].mxu0
    %v1292 = vpop.f32.mrb[0].mxu0
    %v1293 = vadd.f32 %v1238, %v1292
    %v1294 = vpop.f32.mrb[0].mxu0
    %1295 = vdwg.mxu0
    %v1296 = vmul.f32 %v1290, 0.5
    %v1297 = vmul.f32 %v1293, 0.5
    %v1298 = vmul.f32 %v1290, 0.044715
    %v1299 = vmul.f32 %v1293, 0.044715
    %v1300 = vmul.f32 %v1298, %v1290
    %v1301 = vmul.f32 %v1299, %v1293
    %v1302 = vmul.f32 %v1300, %v1290
    %v1303 = vmul.f32 %v1301, %v1293
    %v1304 = vadd.f32 %v1290, %v1302
    %v1305 = vadd.f32 %v1293, %v1303
    %v1306 = vmul.f32 %v1304, 0.7978846
    %v1307 = vmul.f32 %v1305, 0.7978846
    %v1308 = vtanh.pop %v1306
    %v1309 = vtanh.pop %v1307
    %v1310 = vadd.f32 %v1308, 1.0
    %v1311 = vadd.f32 %v1309, 1.0
    %v1312 = vmul.f32 %v1296, %v1310
    %v1313 = vmul.f32 %v1297, %v1311
    %v1314 = vpack.c.bf16 %v1313, %v1312
    %v1315 = vld [vmem:[%s12] sm:$0xf]
    %v1316 = vld [vmem:[%s12 + $0x4] sm:$0xf]
    %v1317 = vld [vmem:[%s12 + $0x8] sm:$0xf]
    %v1318 = vld [vmem:[%s12 + $0xc] sm:$0xf]
    %v1319 = vld [vmem:[%s12 + $0x10] sm:$0xf]
    %v1320 = vld [vmem:[%s12 + $0x14] sm:$0xf]
    %v1321 = vld [vmem:[%s12 + $0x18] sm:$0xf]
    %v1322 = vld [vmem:[%s12 + $0x1c] sm:$0xf]
    %v1323 = vld [vmem:[%s12 + $0x20] sm:$0xf]
    %v1324 = vld [vmem:[%s12 + $0x24] sm:$0xf]
    %v1325 = vld [vmem:[%s12 + $0x28] sm:$0xf]
    %v1326 = vld [vmem:[%s12 + $0x2c] sm:$0xf]
    %v1327 = vld [vmem:[%s12 + $0x30] sm:$0xf]
    %v1328 = vld [vmem:[%s12 + $0x34] sm:$0xf]
    %v1329 = vld [vmem:[%s12 + $0x38] sm:$0xf]
    %v1330 = vld [vmem:[%s12 + $0x3c] sm:$0xf]
    %v1331 = vld [vmem:[%s13] sm:$0x1]
    %v1333 = vlaneseq
    %v1334 = vshrl.u32 %v1333, 7
    %v1335 = vsub.s32 0, %v1334
    %v1336 = vrot.slane %v1331, %v1335
    %v1354 = vunpack.c.l.b16 %v1315
    %v1355 = vunpack.c.l.b16 %v1316
    %v1356 = vunpack.c.l.b16 %v1317
    %v1357 = vunpack.c.l.b16 %v1318
    %v1358 = vunpack.c.l.b16 %v1319
    %v1359 = vunpack.c.l.b16 %v1320
    %v1360 = vunpack.c.l.b16 %v1321
    %v1361 = vunpack.c.l.b16 %v1322
    %v1362 = vunpack.c.l.b16 %v1323
    %v1363 = vunpack.c.l.b16 %v1324
    %v1364 = vunpack.c.l.b16 %v1325
    %v1365 = vunpack.c.l.b16 %v1326
    %v1366 = vunpack.c.l.b16 %v1327
    %v1367 = vunpack.c.l.b16 %v1328
    %v1368 = vunpack.c.l.b16 %v1329
    %v1369 = vunpack.c.l.b16 %v1330
    %v1370 = vpack.c.b16 %v1355, %v1354
    %v1371 = vpack.c.b16 %v1357, %v1356
    %v1372 = vpack.c.b16 %v1359, %v1358
    %v1373 = vpack.c.b16 %v1361, %v1360
    %v1374 = vpack.c.b16 %v1363, %v1362
    %v1375 = vpack.c.b16 %v1365, %v1364
    %v1376 = vpack.c.b16 %v1367, %v1366
    %v1377 = vpack.c.b16 %v1369, %v1368
    %1386 = vmatprep.subr.bf16.mxu0 0
    %1387 = vmatpush1.bf16.msra.mxu0 %v1370
    %1388 = vmatprep.subr.bf16.mxu0 0
    %1389 = vmatpush1.bf16.msra.mxu0 %v1371
    %1390 = vmatprep.subr.bf16.mxu0 0
    %1391 = vmatpush1.bf16.msra.mxu0 %v1372
    %1392 = vmatprep.subr.bf16.mxu0 0
    %1393 = vmatpush1.bf16.msra.mxu0 %v1373
    %1394 = vmatprep.subr.bf16.mxu0 0
    %1395 = vmatpush1.bf16.msra.mxu0 %v1374
    %1396 = vmatprep.subr.bf16.mxu0 0
    %1397 = vmatpush1.bf16.msra.mxu0 %v1375
    %1398 = vmatprep.subr.bf16.mxu0 0
    %1399 = vmatpush1.bf16.msra.mxu0 %v1376
    %1400 = vmatprep.subr.bf16.mxu0 0
    %1401 = vmatpush1.bf16.msra.mxu0 %v1377
    %1402 = vmatprep.subr.bf16.mxu0 0
    %1403 = vmatpush1.bf16.msra.mxu0 0
    %1404 = vmatprep.subr.bf16.mxu0 0
    %1405 = vmatpush1.bf16.msra.mxu0 0
    %1406 = vmatprep.subr.bf16.mxu0 0
    %1407 = vmatpush1.bf16.msra.mxu0 0
    %1408 = vmatprep.subr.bf16.mxu0 0
    %1409 = vmatpush1.bf16.msra.mxu0 0
    %1410 = vmatprep.subr.bf16.mxu0 0
    %1411 = vmatpush1.bf16.msra.mxu0 0
    %1412 = vmatprep.subr.bf16.mxu0 0
    %1413 = vmatpush1.bf16.msra.mxu0 0
    %1414 = vmatprep.subr.bf16.mxu0 0
    %1415 = vmatpush1.bf16.msra.mxu0 0
    %1416 = vmatprep.subr.bf16.mxu0 0
    %1417 = vmatpush1.bf16.msra.mxu0 0
    %1418 = vmatprep.mubr.bf16.mxu0 0
    %1419 = vmatmul.mubr.bf16.gmra.mrb[0].mxu0 %v1314
    %v1420 = vpop.f32.mrb[0].mxu0
    %v1421 = vadd.f32 %v1336, %v1420
    %v1422 = vpop.f32.mrb[0].mxu0
    %v1423 = vpop.f32.mrb[0].mxu0
    %v1424 = vadd.f32 %v1336, %v1423
    %v1425 = vpop.f32.mrb[0].mxu0
    %1426 = vdwg.mxu0
    %v1427 = vadd.f32 %v1182, %v1421
    %v1428 = vadd.f32 %v1183, %v1424
    %v1429 = vpack.c.bf16 %v1428, %v1427
    %v1431 = vunpack.c.l.b16 %v1429
    %v1432 = vunpack.c.h.b16 %v1429
    %v1433 = vpack.c.b16 %v1431, %v1431
    %v1434 = vpack.c.b16 %v1432, %v1432
    %vm1437 = vcmask 257024
    %1438 = vst.msk [vmem:[#allocation2] sm:$0xf] %vm1437, %v1433
    %1439 = vst.msk [vmem:[#allocation2 + $0x4] sm:$0xf] %vm1437, %v1434
    // Predicated region
    $region58: #{tpu_custom_call.1} parent=1 // pred_check
      _
    $region59: #{tpu_custom_call.1} parent=1 // pred_check_branch
      %1441 = sbr.rel (0) target = $region61
    $region60: #{tpu_custom_call.1} parent=1 // pred_region
      %s1443 = ssub.s32 128, 128
      %1444 = vsyncadd [#allocation3], %s1443
      %s1445 = sshll.u32 [#allocation2], 4
      %s1446 = int_to_ptr.vmem [resolvable:$true] %s1445
      %1451 = dma.vmem_to_hbm [thread:$0]  %s1446, 128, %s14, [#allocation3], 64, 64, 4
    $region61: #{tpu_custom_call.1} parent=1 // pred_fallthru
      _
    // Predicated region
    $region62: #{tpu_custom_call.1} parent=1 // pred_check
      _
    $region63: #{tpu_custom_call.1} parent=1 // pred_check_branch
      %1453 = sbr.rel (0) target = $region65
    $region64: #{tpu_custom_call.1} parent=1 // pred_region
      %1454 = dma.done [#allocation3], 128
    $region65: #{tpu_custom_call.1} parent=1 // pred_fallthru
      _
    %1455 = vsyncpa [#allocation3], 1

</llo_original>
